<compile_context>
chip_gen: v7x
topology: tpu7x:2x2x1
jax: 0.10.0
libtpu: 0.0.40
codegen_flags: <defaults>
</compile_context>

<pallas_src>
import functools
import math

import jax
import jax.numpy as jnp
from jax import lax
from jax.experimental import pallas as pl
from jax.experimental.pallas import tpu as pltpu


def _round_up(x, m):
    return (x + m - 1) // m * m


# --------------------------------------------------------------------------
# Stage 1: project K and V once, emit bf16 tiles shaped (B, n_k, Cch, tk).
# --------------------------------------------------------------------------
def _kv_proj_kernel(x_ref, wk_ref, bk_ref, wv_ref, bv_ref, k_ref, v_ref):
    """x_ref: (C, tk) f32; wk: (Cq_pad, C) bf16; wv: (C, C) bf16; biases f32."""
    x = x_ref[...].astype(jnp.bfloat16)                                     # (C, tk)
    k = jnp.dot(wk_ref[...], x, preferred_element_type=jnp.float32) + bk_ref[...]
    v = jnp.dot(wv_ref[...], x, preferred_element_type=jnp.float32) + bv_ref[...]
    k_ref[...] = k.astype(jnp.bfloat16)                                     # (Cq_pad, tk)
    v_ref[...] = v.astype(jnp.bfloat16)                                     # (C, tk)


# --------------------------------------------------------------------------
# Stage 2: flash-style position attention with VMEM-resident K/V per batch.
# --------------------------------------------------------------------------
def _pam_attn_kernel(x_ref, wq_ref, bq_ref, k_ref, v_ref, gamma_ref, out_ref,
                     m_sc, l_sc, acc_sc, *, n_valid, tk, n_k):
    """One (batch, query-tile) grid step.

    x_ref   : (C, tq)            f32   query-projection source + residual
    wq_ref  : (Cq_pad, C)        bf16,  bq_ref: (Cq_pad, 1) f32
    k_ref   : (n_k, Cq_pad, tk)  bf16   resident per batch
    v_ref   : (n_k, C, tk)       bf16   resident per batch
    gamma   : (1, 1)             f32    SMEM scalar
    out_ref : (C, tq)            f32
    scratch : m_sc / l_sc (1, tq) f32,  acc_sc (C, tq) f32
    """
    # Project this query tile (done exactly once per spatial position overall).
    q = (jnp.dot(wq_ref[...], x_ref[...].astype(jnp.bfloat16),
                 preferred_element_type=jnp.float32)
         + bq_ref[...]).astype(jnp.bfloat16)                                # (Cq_pad, tq)

    m_sc[...] = jnp.full_like(m_sc, -jnp.inf)
    l_sc[...] = jnp.zeros_like(l_sc)
    acc_sc[...] = jnp.zeros_like(acc_sc)

    def body(ki, carry):
        k = k_ref[ki]                                                        # (Cq_pad, tk) bf16
        v = v_ref[ki]                                                        # (C, tk) bf16
        # energy^T[key, query]: contract the Cq axis directly -> no transposes.
        e = lax.dot_general(k, q, dimension_numbers=(((0,), (0,)), ((), ())),
                            preferred_element_type=jnp.float32)              # (tk, tq) f32
        if n_valid % tk != 0:  # static: spatial axis was zero-padded -> mask fake keys
            key_pos = ki * tk + lax.broadcasted_iota(jnp.int32, e.shape, 0)
            e = jnp.where(key_pos < n_valid, e, -jnp.inf)

        m_prev = m_sc[...]                                                   # (1, tq)
        m_new = jnp.maximum(m_prev, jnp.max(e, axis=0, keepdims=True))
        alpha = jnp.exp(m_prev - m_new)
        e = jnp.exp(e - m_new)                 # overwrite: single (tk, tq) f32 live
        l_sc[...] = alpha * l_sc[...] + jnp.sum(e, axis=0, keepdims=True)
        p = e.astype(jnp.bfloat16)             # bf16 probabilities for the MXU
        acc_sc[...] = alpha * acc_sc[...] + jnp.dot(
            v, p, preferred_element_type=jnp.float32)                        # (C, tq)
        m_sc[...] = m_new
        return carry

    lax.fori_loop(0, n_k, body, 0)

    # Normalize, scale by gamma, add the f32 residual, emit a lane-dense tile.
    scale = gamma_ref[0, 0] * pl.reciprocal(l_sc[...], approx=True)          # (1, tq)
    out_ref[...] = (acc_sc[...] * scale + x_ref[...]).astype(out_ref.dtype)


def pam_forward(x_nchw, params, *, tq=128, tk=256):
    """PAM_Module forward. x_nchw: (B, C, H, W) f32 -> (B, C, H, W) f32."""
    B, C, H, W = x_nchw.shape
    N = H * W
    Cq = params["wq"].shape[0]
    Cq_pad = _round_up(max(Cq, 1), 8)                 # sublane-align q/k channels
    tile_lcm = tq * tk // math.gcd(tq, tk)
    n_pad = _round_up(N, tile_lcm)                    # lane-align the spatial axis
    n_q = n_pad // tq
    n_k = n_pad // tk

    x = x_nchw.reshape(B, C, N).astype(jnp.float32)
    if n_pad != N:
        x = jnp.pad(x, ((0, 0), (0, 0), (0, n_pad - N)))

    def _pad_qk(w, b):
        w = jnp.pad(w.astype(jnp.float32), ((0, Cq_pad - Cq), (0, 0)))
        b = jnp.pad(b.reshape(Cq, 1).astype(jnp.float32), ((0, Cq_pad - Cq), (0, 0)))
        return w.astype(jnp.bfloat16), b

    wq, bq = _pad_qk(params["wq"], params["bq"])
    wk, bk = _pad_qk(params["wk"], params["bk"])
    wv = params["wv"].astype(jnp.bfloat16)
    bv = params["bv"].reshape(C, 1).astype(jnp.float32)
    gamma = params["gamma"].reshape(1, 1).astype(jnp.float32)

    # ---------------- Stage 1: K/V projection (once, bf16 in HBM) -------------
    proj_flops = int(B * n_k * 2 * tk * C * (Cq_pad + C))
    proj_bytes = int(B * n_pad * C * 4 + B * n_pad * (Cq_pad + C) * 2
                     + 2 * (wk.size + wv.size) + 4 * (bk.size + bv.size))
    k_proj, v_proj = pl.pallas_call(
        _kv_proj_kernel,
        out_shape=(jax.ShapeDtypeStruct((B, n_k, Cq_pad, tk), jnp.bfloat16),
                   jax.ShapeDtypeStruct((B, n_k, C, tk), jnp.bfloat16)),
        grid_spec=pltpu.PrefetchScalarGridSpec(
            num_scalar_prefetch=0,
            grid=(B, n_k),
            in_specs=[
                pl.BlockSpec((None, C, tk), lambda b, i: (b, 0, i)),   # x tile
                pl.BlockSpec((Cq_pad, C), lambda b, i: (0, 0)),        # wk
                pl.BlockSpec((Cq_pad, 1), lambda b, i: (0, 0)),        # bk
                pl.BlockSpec((C, C),      lambda b, i: (0, 0)),        # wv
                pl.BlockSpec((C, 1),      lambda b, i: (0, 0)),        # bv
            ],
            out_specs=(
                pl.BlockSpec((None, None, Cq_pad, tk), lambda b, i: (b, i, 0, 0)),
                pl.BlockSpec((None, None, C, tk),      lambda b, i: (b, i, 0, 0)),
            )),
        compiler_params=pltpu.CompilerParams(
            dimension_semantics=("parallel", "parallel")),
        cost_estimate=pl.CostEstimate(flops=proj_flops, transcendentals=0,
                                      bytes_accessed=proj_bytes),
    )(x, wk, bk, wv, bv)

    # ---------------- Stage 2: attention with resident K/V --------------------
    kernel = functools.partial(_pam_attn_kernel, n_valid=N, tk=tk, n_k=n_k)

    # VMEM footprint: double-buffered resident K/V + streamed x/out tiles +
    # weights + scratch, with generous headroom; sized per review instead of a
    # blanket 48 MiB.  (For very large C*N switch K/V back to per-tile streaming.)
    resident_kv = 2 * (Cq_pad + C) * n_pad * 2
    streamed = 2 * 2 * C * tq * 4
    weights = 2 * (Cq_pad * C * 2 + Cq_pad * 4)
    scratch = (2 * tq + C * tq) * 4
    vmem_limit = min(2 * (resident_kv + streamed + weights + scratch) + (8 << 20),
                     64 << 20)

    attn_flops = int(B * n_q * (2 * tq * C * Cq_pad
                                + n_k * 2 * tk * tq * (Cq_pad + C)))
    attn_trans = int(B * n_q * (n_k * (tk * tq + tq) + tq))
    attn_bytes = int(B * (Cq_pad + C) * n_pad * 2          # K/V resident, once/batch
                     + B * n_q * 2 * C * tq * 4            # x residual in + out
                     + 2 * Cq_pad * C + 4 * Cq_pad + 4)

    out = pl.pallas_call(
        kernel,
        out_shape=jax.ShapeDtypeStruct((B, C, n_pad), jnp.float32),
        grid_spec=pltpu.PrefetchScalarGridSpec(
            num_scalar_prefetch=0,
            grid=(B, n_q),
            in_specs=[
                pl.BlockSpec((None, C, tq), lambda b, qi: (b, 0, qi)),            # x tile
                pl.BlockSpec((Cq_pad, C), lambda b, qi: (0, 0)),                  # wq
                pl.BlockSpec((Cq_pad, 1), lambda b, qi: (0, 0)),                  # bq
                pl.BlockSpec((None, n_k, Cq_pad, tk), lambda b, qi: (b, 0, 0, 0)),  # K (resident)
                pl.BlockSpec((None, n_k, C, tk),      lambda b, qi: (b, 0, 0, 0)),  # V (resident)
                pl.BlockSpec(memory_space=pltpu.MemorySpace.SMEM),                # gamma
            ],
            out_specs=pl.BlockSpec((None, C, tq), lambda b, qi: (b, 0, qi)),
            scratch_shapes=[
                pltpu.VMEM((1, tq), jnp.float32),    # running max
                pltpu.VMEM((1, tq), jnp.float32),    # running sum
                pltpu.VMEM((C, tq), jnp.float32),    # output accumulator
            ]),
        compiler_params=pltpu.CompilerParams(
            dimension_semantics=("parallel", "parallel"),
            vmem_limit_bytes=int(vmem_limit)),
        cost_estimate=pl.CostEstimate(flops=attn_flops, transcendentals=attn_trans,
                                      bytes_accessed=attn_bytes),
    )(x, wq, bq, k_proj, v_proj, gamma)

    return out[:, :, :N].reshape(B, C, H, W)


# --------------------------------------------------------------------------
# Pure-JAX reference and parameter init (for the self-test).
# --------------------------------------------------------------------------
def pam_reference(x_nchw, params):
    """Pure-JAX f32 reference mirroring the PyTorch forward."""
    B, C, H, W = x_nchw.shape
    N = H * W
    x = x_nchw.reshape(B, C, N)
    q = jnp.einsum("oc,bcn->bon", params["wq"], x) + params["bq"][None, :, None]
    k = jnp.einsum("oc,bcn->bon", params["wk"], x) + params["bk"][None, :, None]
    v = jnp.einsum("oc,bcn->bon", params["wv"], x) + params["bv"][None, :, None]
    energy = jnp.einsum("bcn,bcm->bnm", q, k)            # (B, N, N): [query, key]
    attn = jax.nn.softmax(energy, axis=-1)
    out = jnp.einsum("bcn,bmn->bcm", v, attn)            # out[:, :, query]
    out = params["gamma"][0] * out + x
    return out.reshape(B, C, H, W)


def init_params(key, C):
    Cq = C // 16
    k1, k2, k3, k4, k5, k6 = jax.random.split(key, 6)
    scale = 0.1
    return {
        "wq": scale * jax.random.normal(k1, (Cq, C), jnp.float32),
        "bq": scale * jax.random.normal(k2, (Cq,), jnp.float32),
        "wk": scale * jax.random.normal(k3, (Cq, C), jnp.float32),
        "bk": scale * jax.random.normal(k4, (Cq,), jnp.float32),
        "wv": scale * jax.random.normal(k5, (C, C), jnp.float32),
        "bv": scale * jax.random.normal(k6, (C,), jnp.float32),
        # PyTorch inits gamma to 0 (output == input); use a nonzero value so the
        # attention path is actually exercised by the test.
        "gamma": jnp.full((1,), 0.5, jnp.float32),
    }


if __name__ == "__main__":
    key = jax.random.PRNGKey(0)
    fwd = jax.jit(pam_forward)
    shapes = [
        (2, 32, 16, 16),   # N=256: 2 query tiles, 1 key tile
        (1, 32, 12, 12),   # N=144: padded keys exercise the -inf mask path
        (1, 32, 24, 24),   # N=576: 3 key tiles -> multi-step online softmax
    ]
    for shape in shapes:
        B, C, H, W = shape
        key, kx, kp = jax.random.split(key, 3)
        x = jax.random.normal(kx, shape, jnp.float32)
        params = init_params(kp, C)
        out = jax.block_until_ready(fwd(x, params))
        ref = pam_reference(x, params)
        assert out.shape == shape
        err = float(jnp.max(jnp.abs(out - ref)))
        # bf16 MXU operands + approx reciprocal -> loosened tolerance vs f32 ref.
        assert jnp.allclose(out, ref, rtol=2e-2, atol=2e-2), f"{shape}: max|err|={err}"
    print("KERNEL_OK")
</pallas_src>

<mosaic_0001>
module attributes {stable_mosaic.version = 11 : i64} {
  func.func @_kv_proj_kernel(%arg0: i32, %arg1: i32, %arg2: memref<1x32x256xf32, #tpu.memory_space<vmem>>, %arg3: memref<8x32xbf16, #tpu.memory_space<vmem>>, %arg4: memref<8x1xf32, #tpu.memory_space<vmem>>, %arg5: memref<32x32xbf16, #tpu.memory_space<vmem>>, %arg6: memref<32x1xf32, #tpu.memory_space<vmem>>, %arg7: memref<1x1x8x256xbf16, #tpu.memory_space<vmem>>, %arg8: memref<1x1x32x256xbf16, #tpu.memory_space<vmem>>) attributes {dimension_semantics = [#tpu.dimension_semantics<parallel>, #tpu.dimension_semantics<parallel>], iteration_bounds = array<i64: 2, 1>, scalar_prefetch = 0 : i64, scratch_operands = 0 : i64, tpu.core_type = #tpu.core_type<tc>, window_params = [{transform_indices = @transform_0, window_bounds = array<i64: 1, 32, 256>}, {pipeline_mode = #tpu.pipeline_mode<synchronous>, transform_indices = @transform_1, window_bounds = array<i64: 8, 32>}, {pipeline_mode = #tpu.pipeline_mode<synchronous>, transform_indices = @transform_2, window_bounds = array<i64: 8, 1>}, {pipeline_mode = #tpu.pipeline_mode<synchronous>, transform_indices = @transform_3, window_bounds = array<i64: 32, 32>}, {pipeline_mode = #tpu.pipeline_mode<synchronous>, transform_indices = @transform_4, window_bounds = array<i64: 32, 1>}, {transform_indices = @transform_5, window_bounds = array<i64: 1, 1, 8, 256>}, {transform_indices = @transform_6, window_bounds = array<i64: 1, 1, 32, 256>}]} {
    %c0 = arith.constant 0 : index
    %c0_0 = arith.constant 0 : index
    %c0_1 = arith.constant 0 : index
    %0 = vector.load %arg2[%c0, %c0_0, %c0_1] : memref<1x32x256xf32, #tpu.memory_space<vmem>>, vector<1x32x256xf32>
    %1 = vector.shape_cast %0 : vector<1x32x256xf32> to vector<32x256xf32>
    %2 = arith.truncf %1 : vector<32x256xf32> to vector<32x256xbf16>
    %c0_2 = arith.constant 0 : index
    %c0_3 = arith.constant 0 : index
    %3 = vector.load %arg3[%c0_2, %c0_3] : memref<8x32xbf16, #tpu.memory_space<vmem>>, vector<8x32xbf16>
    %cst = arith.constant dense<0.000000e+00> : vector<8x256xf32>
    %4 = tpu.matmul %3, %2, %cst {dimension_numbers = #tpu.dot_dimension_numbers<[1], [0], [0], [1], [0, 0, 1, 1], [], []>} : vector<8x32xbf16>, vector<32x256xbf16>, vector<8x256xf32> -> vector<8x256xf32>
    %c0_4 = arith.constant 0 : index
    %c0_5 = arith.constant 0 : index
    %5 = vector.load %arg4[%c0_4, %c0_5] : memref<8x1xf32, #tpu.memory_space<vmem>>, vector<8x1xf32>
    %6 = vector.broadcast %5 : vector<8x1xf32> to vector<8x256xf32>
    %7 = arith.addf %4, %6 : vector<8x256xf32>
    %c0_6 = arith.constant 0 : index
    %c0_7 = arith.constant 0 : index
    %8 = vector.load %arg5[%c0_6, %c0_7] : memref<32x32xbf16, #tpu.memory_space<vmem>>, vector<32x32xbf16>
    %cst_8 = arith.constant dense<0.000000e+00> : vector<32x256xf32>
    %9 = tpu.matmul %8, %2, %cst_8 {dimension_numbers = #tpu.dot_dimension_numbers<[1], [0], [0], [1], [0, 0, 1, 1], [], []>} : vector<32x32xbf16>, vector<32x256xbf16>, vector<32x256xf32> -> vector<32x256xf32>
    %c0_9 = arith.constant 0 : index
    %c0_10 = arith.constant 0 : index
    %10 = vector.load %arg6[%c0_9, %c0_10] : memref<32x1xf32, #tpu.memory_space<vmem>>, vector<32x1xf32>
    %11 = vector.broadcast %10 : vector<32x1xf32> to vector<32x256xf32>
    %12 = arith.addf %9, %11 : vector<32x256xf32>
    %13 = arith.truncf %7 : vector<8x256xf32> to vector<8x256xbf16>
    %c0_11 = arith.constant 0 : index
    %c0_12 = arith.constant 0 : index
    %c0_13 = arith.constant 0 : index
    %c0_14 = arith.constant 0 : index
    %14 = vector.load %arg7[%c0_11, %c0_12, %c0_13, %c0_14] : memref<1x1x8x256xbf16, #tpu.memory_space<vmem>>, vector<1x1x8x256xbf16>
    %15 = vector.shape_cast %14 : vector<1x1x8x256xbf16> to vector<8x256xbf16>
    %16 = vector.shape_cast %13 : vector<8x256xbf16> to vector<1x1x8x256xbf16>
    tpu.vector_store %arg7[%c0_11, %c0_12, %c0_13, %c0_14], %16 {strides = array<i32>} : memref<1x1x8x256xbf16, #tpu.memory_space<vmem>>, vector<1x1x8x256xbf16>,
    %17 = arith.truncf %12 : vector<32x256xf32> to vector<32x256xbf16>
    %c0_15 = arith.constant 0 : index
    %c0_16 = arith.constant 0 : index
    %c0_17 = arith.constant 0 : index
    %c0_18 = arith.constant 0 : index
    %18 = vector.load %arg8[%c0_15, %c0_16, %c0_17, %c0_18] : memref<1x1x32x256xbf16, #tpu.memory_space<vmem>>, vector<1x1x32x256xbf16>
    %19 = vector.shape_cast %18 : vector<1x1x32x256xbf16> to vector<32x256xbf16>
    %20 = vector.shape_cast %17 : vector<32x256xbf16> to vector<1x1x32x256xbf16>
    tpu.vector_store %arg8[%c0_15, %c0_16, %c0_17, %c0_18], %20 {strides = array<i32>} : memref<1x1x32x256xbf16, #tpu.memory_space<vmem>>, vector<1x1x32x256xbf16>,
    return
  }
  func.func @transform_0(%arg0: i32, %arg1: i32) -> (i32, i32, i32) {
    %c0_i32 = arith.constant 0 : i32
    %c0_i32_0 = arith.constant 0 : i32
    return %arg0, %c0_i32, %arg1 : i32, i32, i32
  }
  func.func @transform_1(%arg0: i32, %arg1: i32) -> (i32, i32) {
    %c0_i32 = arith.constant 0 : i32
    %c0_i32_0 = arith.constant 0 : i32
    %c0_i32_1 = arith.constant 0 : i32
    return %c0_i32, %c0_i32_0 : i32, i32
  }
  func.func @transform_2(%arg0: i32, %arg1: i32) -> (i32, i32) {
    %c0_i32 = arith.constant 0 : i32
    %c0_i32_0 = arith.constant 0 : i32
    %c0_i32_1 = arith.constant 0 : i32
    return %c0_i32, %c0_i32_0 : i32, i32
  }
  func.func @transform_3(%arg0: i32, %arg1: i32) -> (i32, i32) {
    %c0_i32 = arith.constant 0 : i32
    %c0_i32_0 = arith.constant 0 : i32
    %c0_i32_1 = arith.constant 0 : i32
    return %c0_i32, %c0_i32_0 : i32, i32
  }
  func.func @transform_4(%arg0: i32, %arg1: i32) -> (i32, i32) {
    %c0_i32 = arith.constant 0 : i32
    %c0_i32_0 = arith.constant 0 : i32
    %c0_i32_1 = arith.constant 0 : i32
    return %c0_i32, %c0_i32_0 : i32, i32
  }
  func.func @transform_5(%arg0: i32, %arg1: i32) -> (i32, i32, i32, i32) {
    %c0_i32 = arith.constant 0 : i32
    %c0_i32_0 = arith.constant 0 : i32
    %c0_i32_1 = arith.constant 0 : i32
    return %arg0, %arg1, %c0_i32, %c0_i32_0 : i32, i32, i32, i32
  }
  func.func @transform_6(%arg0: i32, %arg1: i32) -> (i32, i32, i32, i32) {
    %c0_i32 = arith.constant 0 : i32
    %c0_i32_0 = arith.constant 0 : i32
    %c0_i32_1 = arith.constant 0 : i32
    return %arg0, %arg1, %c0_i32, %c0_i32_0 : i32, i32, i32, i32
  }
}

module attributes {stable_mosaic.version = 11 : i64} {
  func.func @_pam_attn_kernel(%arg0: i32, %arg1: i32, %arg2: memref<1x32x128xf32, #tpu.memory_space<vmem>>, %arg3: memref<8x32xbf16, #tpu.memory_space<vmem>>, %arg4: memref<8x1xf32, #tpu.memory_space<vmem>>, %arg5: memref<1x1x8x256xbf16, #tpu.memory_space<vmem>>, %arg6: memref<1x1x32x256xbf16, #tpu.memory_space<vmem>>, %arg7: memref<1x1xf32, #tpu.memory_space<smem>>, %arg8: memref<1x32x128xf32, #tpu.memory_space<vmem>>, %arg9: memref<1x128xf32, #tpu.memory_space<vmem>>, %arg10: memref<1x128xf32, #tpu.memory_space<vmem>>, %arg11: memref<32x128xf32, #tpu.memory_space<vmem>>) attributes {dimension_semantics = [#tpu.dimension_semantics<parallel>, #tpu.dimension_semantics<parallel>], iteration_bounds = array<i64: 2, 2>, scalar_prefetch = 0 : i64, scratch_operands = 3 : i64, tpu.core_type = #tpu.core_type<tc>, window_params = [{transform_indices = @transform_0, window_bounds = array<i64: 1, 32, 128>}, {pipeline_mode = #tpu.pipeline_mode<synchronous>, transform_indices = @transform_1, window_bounds = array<i64: 8, 32>}, {pipeline_mode = #tpu.pipeline_mode<synchronous>, transform_indices = @transform_2, window_bounds = array<i64: 8, 1>}, {transform_indices = @transform_3, window_bounds = array<i64: 1, 1, 8, 256>}, {transform_indices = @transform_4, window_bounds = array<i64: 1, 1, 32, 256>}, {transform_indices = @transform_5, window_bounds = array<i64: 1, 1>}, {transform_indices = @transform_6, window_bounds = array<i64: 1, 32, 128>}]} {
    %c0 = arith.constant 0 : index
    %c0_0 = arith.constant 0 : index
    %0 = vector.load %arg3[%c0, %c0_0] : memref<8x32xbf16, #tpu.memory_space<vmem>>, vector<8x32xbf16>
    %c0_1 = arith.constant 0 : index
    %c0_2 = arith.constant 0 : index
    %c0_3 = arith.constant 0 : index
    %1 = vector.load %arg2[%c0_1, %c0_2, %c0_3] : memref<1x32x128xf32, #tpu.memory_space<vmem>>, vector<1x32x128xf32>
    %2 = vector.shape_cast %1 : vector<1x32x128xf32> to vector<32x128xf32>
    %3 = arith.truncf %2 : vector<32x128xf32> to vector<32x128xbf16>
    %cst = arith.constant dense<0.000000e+00> : vector<8x128xf32>
    %4 = tpu.matmul %0, %3, %cst {dimension_numbers = #tpu.dot_dimension_numbers<[1], [0], [0], [1], [0, 0, 1, 1], [], []>} : vector<8x32xbf16>, vector<32x128xbf16>, vector<8x128xf32> -> vector<8x128xf32>
    %c0_4 = arith.constant 0 : index
    %c0_5 = arith.constant 0 : index
    %5 = vector.load %arg4[%c0_4, %c0_5] : memref<8x1xf32, #tpu.memory_space<vmem>>, vector<8x1xf32>
    %6 = vector.broadcast %5 : vector<8x1xf32> to vector<8x128xf32>
    %7 = arith.addf %4, %6 : vector<8x128xf32>
    %8 = arith.truncf %7 : vector<8x128xf32> to vector<8x128xbf16>
    %cst_6 = arith.constant 0xFF800000 : f32
    %9 = vector.broadcast %cst_6 : f32 to vector<1x128xf32>
    %c0_7 = arith.constant 0 : index
    %c0_8 = arith.constant 0 : index
    %10 = vector.load %arg9[%c0_7, %c0_8] : memref<1x128xf32, #tpu.memory_space<vmem>>, vector<1x128xf32>
    tpu.vector_store %arg9[%c0_7, %c0_8], %9 {strides = array<i32>} : memref<1x128xf32, #tpu.memory_space<vmem>>, vector<1x128xf32>,
    %cst_9 = arith.constant 0.000000e+00 : f32
    %11 = vector.broadcast %cst_9 : f32 to vector<1x128xf32>
    %c0_10 = arith.constant 0 : index
    %c0_11 = arith.constant 0 : index
    %12 = vector.load %arg10[%c0_10, %c0_11] : memref<1x128xf32, #tpu.memory_space<vmem>>, vector<1x128xf32>
    tpu.vector_store %arg10[%c0_10, %c0_11], %11 {strides = array<i32>} : memref<1x128xf32, #tpu.memory_space<vmem>>, vector<1x128xf32>,
    %cst_12 = arith.constant 0.000000e+00 : f32
    %13 = vector.broadcast %cst_12 : f32 to vector<32x128xf32>
    %c0_13 = arith.constant 0 : index
    %c0_14 = arith.constant 0 : index
    %14 = vector.load %arg11[%c0_13, %c0_14] : memref<32x128xf32, #tpu.memory_space<vmem>>, vector<32x128xf32>
    tpu.vector_store %arg11[%c0_13, %c0_14], %13 {strides = array<i32>} : memref<32x128xf32, #tpu.memory_space<vmem>>, vector<32x128xf32>,
    %c0_i32 = arith.constant 0 : i32
    %c0_15 = arith.constant 0 : index
    %15 = arith.index_cast %c0_i32 : i32 to index
    %c0_16 = arith.constant 0 : index
    %c0_17 = arith.constant 0 : index
    %16 = vector.load %arg5[%c0_15, %15, %c0_16, %c0_17] : memref<1x1x8x256xbf16, #tpu.memory_space<vmem>>, vector<1x1x8x256xbf16>
    %17 = vector.shape_cast %16 : vector<1x1x8x256xbf16> to vector<8x256xbf16>
    %c0_18 = arith.constant 0 : index
    %18 = arith.index_cast %c0_i32 : i32 to index
    %c0_19 = arith.constant 0 : index
    %c0_20 = arith.constant 0 : index
    %19 = vector.load %arg6[%c0_18, %18, %c0_19, %c0_20] : memref<1x1x32x256xbf16, #tpu.memory_space<vmem>>, vector<1x1x32x256xbf16>
    %20 = vector.shape_cast %19 : vector<1x1x32x256xbf16> to vector<32x256xbf16>
    %cst_21 = arith.constant dense<0.000000e+00> : vector<256x128xf32>
    %21 = tpu.matmul %17, %8, %cst_21 {dimension_numbers = #tpu.dot_dimension_numbers<[0], [0], [1], [1], [0, 1, 1, 1], [], []>} : vector<8x256xbf16>, vector<8x128xbf16>, vector<256x128xf32> -> vector<256x128xf32>
    %c0_22 = arith.constant 0 : index
    %c0_23 = arith.constant 0 : index
    %22 = vector.load %arg9[%c0_22, %c0_23] : memref<1x128xf32, #tpu.memory_space<vmem>>, vector<1x128xf32>
    %cst_24 = arith.constant dense<0xFF800000> : vector<128xf32>
    %23 = vector.multi_reduction <maximumf>, %21, %cst_24 [0] : vector<256x128xf32> to vector<128xf32>
    %24 = vector.shape_cast %23 : vector<128xf32> to vector<1x128xf32>
    %25 = arith.maximumf %22, %24 : vector<1x128xf32>
    %26 = arith.subf %22, %25 : vector<1x128xf32>
    %27 = math.exp %26 : vector<1x128xf32>
    %28 = vector.broadcast %25 : vector<1x128xf32> to vector<256x128xf32>
    %29 = arith.subf %21, %28 : vector<256x128xf32>
    %30 = math.exp %29 : vector<256x128xf32>
    %c0_25 = arith.constant 0 : index
    %c0_26 = arith.constant 0 : index
    %31 = vector.load %arg10[%c0_25, %c0_26] : memref<1x128xf32, #tpu.memory_space<vmem>>, vector<1x128xf32>
    %32 = arith.mulf %27, %31 : vector<1x128xf32>
    %cst_27 = arith.constant dense<0.000000e+00> : vector<128xf32>
    %33 = vector.multi_reduction <add>, %30, %cst_27 [0] : vector<256x128xf32> to vector<128xf32>
    %34 = vector.shape_cast %33 : vector<128xf32> to vector<1x128xf32>
    %35 = arith.addf %32, %34 : vector<1x128xf32>
    %c0_28 = arith.constant 0 : index
    %c0_29 = arith.constant 0 : index
    %36 = vector.load %arg10[%c0_28, %c0_29] : memref<1x128xf32, #tpu.memory_space<vmem>>, vector<1x128xf32>
    tpu.vector_store %arg10[%c0_28, %c0_29], %35 {strides = array<i32>} : memref<1x128xf32, #tpu.memory_space<vmem>>, vector<1x128xf32>,
    %37 = arith.truncf %30 : vector<256x128xf32> to vector<256x128xbf16>
    %c0_30 = arith.constant 0 : index
    %c0_31 = arith.constant 0 : index
    %38 = vector.load %arg11[%c0_30, %c0_31] : memref<32x128xf32, #tpu.memory_space<vmem>>, vector<32x128xf32>
    %39 = vector.broadcast %27 : vector<1x128xf32> to vector<32x128xf32>
    %40 = arith.mulf %39, %38 : vector<32x128xf32>
    %cst_32 = arith.constant dense<0.000000e+00> : vector<32x128xf32>
    %41 = tpu.matmul %20, %37, %cst_32 {dimension_numbers = #tpu.dot_dimension_numbers<[1], [0], [0], [1], [0, 0, 1, 1], [], []>} : vector<32x256xbf16>, vector<256x128xbf16>, vector<32x128xf32> -> vector<32x128xf32>
    %42 = arith.addf %40, %41 : vector<32x128xf32>
    %c0_33 = arith.constant 0 : index
    %c0_34 = arith.constant 0 : index
    %43 = vector.load %arg11[%c0_33, %c0_34] : memref<32x128xf32, #tpu.memory_space<vmem>>, vector<32x128xf32>
    tpu.vector_store %arg11[%c0_33, %c0_34], %42 {strides = array<i32>} : memref<32x128xf32, #tpu.memory_space<vmem>>, vector<32x128xf32>,
    %c0_35 = arith.constant 0 : index
    %c0_36 = arith.constant 0 : index
    %44 = vector.load %arg9[%c0_35, %c0_36] : memref<1x128xf32, #tpu.memory_space<vmem>>, vector<1x128xf32>
    tpu.vector_store %arg9[%c0_35, %c0_36], %25 {strides = array<i32>} : memref<1x128xf32, #tpu.memory_space<vmem>>, vector<1x128xf32>,
    %c1_i32 = arith.constant 1 : i32
    %c0_37 = arith.constant 0 : index
    %c0_38 = arith.constant 0 : index
    %45 = memref.load %arg7[%c0_37, %c0_38] : memref<1x1xf32, #tpu.memory_space<smem>>
    %c0_39 = arith.constant 0 : index
    %c0_40 = arith.constant 0 : index
    %46 = vector.load %arg10[%c0_39, %c0_40] : memref<1x128xf32, #tpu.memory_space<vmem>>, vector<1x128xf32>
    %47 = tpu.reciprocal %46 {approx = true} : vector<1x128xf32> -> vector<1x128xf32>
    %48 = vector.broadcast %45 : f32 to vector<1x128xf32>
    %49 = arith.mulf %48, %47 : vector<1x128xf32>
    %c0_41 = arith.constant 0 : index
    %c0_42 = arith.constant 0 : index
    %50 = vector.load %arg11[%c0_41, %c0_42] : memref<32x128xf32, #tpu.memory_space<vmem>>, vector<32x128xf32>
    %51 = vector.broadcast %49 : vector<1x128xf32> to vector<32x128xf32>
    %52 = arith.mulf %50, %51 : vector<32x128xf32>
    %c0_43 = arith.constant 0 : index
    %c0_44 = arith.constant 0 : index
    %c0_45 = arith.constant 0 : index
    %53 = vector.load %arg2[%c0_43, %c0_44, %c0_45] : memref<1x32x128xf32, #tpu.memory_space<vmem>>, vector<1x32x128xf32>
    %54 = vector.shape_cast %53 : vector<1x32x128xf32> to vector<32x128xf32>
    %55 = arith.addf %52, %54 : vector<32x128xf32>
    %c0_46 = arith.constant 0 : index
    %c0_47 = arith.constant 0 : index
    %c0_48 = arith.constant 0 : index
    %56 = vector.load %arg8[%c0_46, %c0_47, %c0_48] : memref<1x32x128xf32, #tpu.memory_space<vmem>>, vector<1x32x128xf32>
    %57 = vector.shape_cast %56 : vector<1x32x128xf32> to vector<32x128xf32>
    %58 = vector.shape_cast %55 : vector<32x128xf32> to vector<1x32x128xf32>
    tpu.vector_store %arg8[%c0_46, %c0_47, %c0_48], %58 {strides = array<i32>} : memref<1x32x128xf32, #tpu.memory_space<vmem>>, vector<1x32x128xf32>,
    return
  }
  func.func @transform_0(%arg0: i32, %arg1: i32) -> (i32, i32, i32) {
    %c0_i32 = arith.constant 0 : i32
    %c0_i32_0 = arith.constant 0 : i32
    return %arg0, %c0_i32, %arg1 : i32, i32, i32
  }
  func.func @transform_1(%arg0: i32, %arg1: i32) -> (i32, i32) {
    %c0_i32 = arith.constant 0 : i32
    %c0_i32_0 = arith.constant 0 : i32
    %c0_i32_1 = arith.constant 0 : i32
    return %c0_i32, %c0_i32_0 : i32, i32
  }
  func.func @transform_2(%arg0: i32, %arg1: i32) -> (i32, i32) {
    %c0_i32 = arith.constant 0 : i32
    %c0_i32_0 = arith.constant 0 : i32
    %c0_i32_1 = arith.constant 0 : i32
    return %c0_i32, %c0_i32_0 : i32, i32
  }
  func.func @transform_3(%arg0: i32, %arg1: i32) -> (i32, i32, i32, i32) {
    %c0_i32 = arith.constant 0 : i32
    %c0_i32_0 = arith.constant 0 : i32
    %c0_i32_1 = arith.constant 0 : i32
    %c0_i32_2 = arith.constant 0 : i32
    return %arg0, %c0_i32, %c0_i32_0, %c0_i32_1 : i32, i32, i32, i32
  }
  func.func @transform_4(%arg0: i32, %arg1: i32) -> (i32, i32, i32, i32) {
    %c0_i32 = arith.constant 0 : i32
    %c0_i32_0 = arith.constant 0 : i32
    %c0_i32_1 = arith.constant 0 : i32
    %c0_i32_2 = arith.constant 0 : i32
    return %arg0, %c0_i32, %c0_i32_0, %c0_i32_1 : i32, i32, i32, i32
  }
  func.func @transform_5(%arg0: i32, %arg1: i32) -> (i32, i32) {
    %c0_i32 = arith.constant 0 : i32
    %c0_i32_0 = arith.constant 0 : i32
    %c0_i32_1 = arith.constant 0 : i32
    return %c0_i32, %c0_i32_0 : i32, i32
  }
  func.func @transform_6(%arg0: i32, %arg1: i32) -> (i32, i32, i32) {
    %c0_i32 = arith.constant 0 : i32
    %c0_i32_0 = arith.constant 0 : i32
    return %arg0, %c0_i32, %arg1 : i32, i32, i32
  }
}

</mosaic_0001>

<llo_original>
// kernel: pam_forward.2
$region0: #{pam_forward.2}
  #allocation0 [shape = 'u32[]', space=smem, size = 0x4, offset = 0x4, fixed_abs, tag = 'smem constant byte address 0x4 - core index']
  #allocation1 [shape = 'u32[144,128]{1,0:T(1,128)}', space=vmem, size = 0x12000, scoped, tag = 'internal scratch']
  %s0 = inlined_call_operand.vmem [shape: f32[2,32,256], index: 0, kind: input, shape index: {}]
  %s1 = inlined_call_operand.vmem [shape: bf16[8,32], index: 1, kind: input, shape index: {}]
  %s2 = inlined_call_operand.vmem [shape: f32[8,1], index: 2, kind: input, shape index: {}]
  %s3 = inlined_call_operand.vmem [shape: bf16[32,32], index: 3, kind: input, shape index: {}]
  %s4 = inlined_call_operand.vmem [shape: f32[32,1], index: 4, kind: input, shape index: {}]
  %s5 = inlined_call_operand.vmem [shape: bf16[2,1,8,256], index: 5, kind: output, shape index: {0}]
  %s6 = inlined_call_operand.vmem [shape: bf16[2,1,32,256], index: 6, kind: output, shape index: {1}]
  %7 = xla_tuple %s5, %s6
  %s8 = sld [smem:[#allocation0]]
  $region61: #{pam_forward.2} parent=0
    _
  %s10 = ssub.s32 1, %s8
  %s11 = scalar_select 0, %s10, %s8
  loop: start=0, step=1, limit=4
  $region2: #{pam_forward.2} parent=0 // loop_pre_header
    _
  $region3: #{pam_forward.2} parent=0 // loop_header
    %s13 = sphi 0, %s17
    %p14 = scmp.ge.s32.totalorder %s13, 4
    %s20 = sphi 0, %s32
    %s21 = sphi 0, %s28
    %s22 = sphi 0, %s20
    %s23 = sphi 0, %s21
    %s24 = sphi 0, %s22
    %s25 = sphi 0, %s23
    %s37 = sphi 0, %s39
    %s40 = sphi 0, %s37
    %s41 = sphi 0, %s40
    %s57 = sphi 0, %s41
    %s61 = sphi 0, %s61
    %s63 = sphi 0, %s61
    %s64 = sphi 0, %s63
    %s78 = sphi 0, %s64
    %s82 = sphi 0, %s82
    %s84 = sphi 0, %s82
    %s85 = sphi 0, %s84
    %s99 = sphi 0, %s85
    %s103 = sphi 0, %s103
    %s105 = sphi 0, %s103
    %s106 = sphi 0, %s105
    %s120 = sphi 0, %s106
    %s124 = sphi 0, %s124
    %s126 = sphi 0, %s124
    %s127 = sphi 0, %s126
    %s141 = sphi 0, %s127
    %s149 = sphi 0, %s151
    %s152 = sphi 0, %s149
    %s153 = sphi 0, %s152
    %s169 = sphi 0, %s153
    %s177 = sphi 0, %s179
    %s180 = sphi 0, %s177
    %s181 = sphi 0, %s180
    %s197 = sphi 0, %s181
  $region4: #{pam_forward.2} parent=0 // loop_header_branch
    %16 = sbr.rel (%p14) target = $region8
  $region5: #{pam_forward.2} parent=0 // loop_body
    %s18 = ssub.s32 %s13, 1
    %s19 = ssub.s32 %s13, 2
    %s26 = sadd.s32 1, %s21
    %p27 = scmp.ge.s32.totalorder %s26, 1
    %s28 = scalar_select %p27, 0, %s26
    %s29 = sadd.s32 1, %s20
    %s30 = scalar_select %p27, %s29, %s20
    %p31 = scmp.ge.s32.totalorder %s30, 2
    %s32 = scalar_select %p31, 0, %s30
    %s33 = ssub.s32 %s20, %s32
    %s34 = ssub.s32 %s21, %s28
    %s35 = sor.u32 %s33, %s34
    %p36 = scmp.eq.s32.totalorder %s35, 0
    %s38 = sadd.s32 %s37, 1
    %s39 = scalar_select %p36, %s37, %s38
    %p42 = pneg %p36
    %p43 = scmp.eq.s32.totalorder %s13, 1
    %p44 = por %p42, %p43
    %p45 = scmp.ne.s32.totalorder %s37, %s40
    %p46 = scmp.eq.s32.totalorder %s13, 0
    %p47 = por %p45, %p46
    %p48 = scmp.ne.s32.totalorder %s37, %s40
    %p49 = scmp.eq.s32.totalorder %s18, 1
    %p50 = por %p48, %p49
    %p51 = scmp.ne.s32.totalorder %s40, %s41
    %p52 = scmp.eq.s32.totalorder %s18, 0
    %p53 = por %p51, %p52
    %p54 = scmp.ne.s32.totalorder %s40, %s41
    %p55 = scmp.eq.s32.totalorder %s19, 1
    %p56 = por %p54, %p55
    %p58 = scmp.ne.s32.totalorder %s41, %s57
    %p59 = scmp.eq.s32.totalorder %s19, 0
    %p60 = por %p58, %p59
    %s62 = sadd.s32 %s61, 1
    %p65 = scmp.eq.s32.totalorder %s13, 1
    %p66 = scmp.ne.s32.totalorder %s61, %s63
    %p67 = scmp.eq.s32.totalorder %s13, 0
    %p68 = por %p66, %p67
    %p69 = scmp.ne.s32.totalorder %s61, %s63
    %p70 = scmp.eq.s32.totalorder %s18, 1
    %p71 = por %p69, %p70
    %p72 = scmp.ne.s32.totalorder %s63, %s64
    %p73 = scmp.eq.s32.totalorder %s18, 0
    %p74 = por %p72, %p73
    %p75 = scmp.ne.s32.totalorder %s63, %s64
    %p76 = scmp.eq.s32.totalorder %s19, 1
    %p77 = por %p75, %p76
    %p79 = scmp.ne.s32.totalorder %s64, %s78
    %p80 = scmp.eq.s32.totalorder %s19, 0
    %p81 = por %p79, %p80
    %s83 = sadd.s32 %s82, 1
    %p86 = scmp.eq.s32.totalorder %s13, 1
    %p87 = scmp.ne.s32.totalorder %s82, %s84
    %p88 = scmp.eq.s32.totalorder %s13, 0
    %p89 = por %p87, %p88
    %p90 = scmp.ne.s32.totalorder %s82, %s84
    %p91 = scmp.eq.s32.totalorder %s18, 1
    %p92 = por %p90, %p91
    %p93 = scmp.ne.s32.totalorder %s84, %s85
    %p94 = scmp.eq.s32.totalorder %s18, 0
    %p95 = por %p93, %p94
    %p96 = scmp.ne.s32.totalorder %s84, %s85
    %p97 = scmp.eq.s32.totalorder %s19, 1
    %p98 = por %p96, %p97
    %p100 = scmp.ne.s32.totalorder %s85, %s99
    %p101 = scmp.eq.s32.totalorder %s19, 0
    %p102 = por %p100, %p101
    %s104 = sadd.s32 %s103, 1
    %p107 = scmp.eq.s32.totalorder %s13, 1
    %p108 = scmp.ne.s32.totalorder %s103, %s105
    %p109 = scmp.eq.s32.totalorder %s13, 0
    %p110 = por %p108, %p109
    %p111 = scmp.ne.s32.totalorder %s103, %s105
    %p112 = scmp.eq.s32.totalorder %s18, 1
    %p113 = por %p111, %p112
    %p114 = scmp.ne.s32.totalorder %s105, %s106
    %p115 = scmp.eq.s32.totalorder %s18, 0
    %p116 = por %p114, %p115
    %p117 = scmp.ne.s32.totalorder %s105, %s106
    %p118 = scmp.eq.s32.totalorder %s19, 1
    %p119 = por %p117, %p118
    %p121 = scmp.ne.s32.totalorder %s106, %s120
    %p122 = scmp.eq.s32.totalorder %s19, 0
    %p123 = por %p121, %p122
    %s125 = sadd.s32 %s124, 1
    %p128 = scmp.eq.s32.totalorder %s13, 1
    %p129 = scmp.ne.s32.totalorder %s124, %s126
    %p130 = scmp.eq.s32.totalorder %s13, 0
    %p131 = por %p129, %p130
    %p132 = scmp.ne.s32.totalorder %s124, %s126
    %p133 = scmp.eq.s32.totalorder %s18, 1
    %p134 = por %p132, %p133
    %p135 = scmp.ne.s32.totalorder %s126, %s127
    %p136 = scmp.eq.s32.totalorder %s18, 0
    %p137 = por %p135, %p136
    %p138 = scmp.ne.s32.totalorder %s126, %s127
    %p139 = scmp.eq.s32.totalorder %s19, 1
    %p140 = por %p138, %p139
    %p142 = scmp.ne.s32.totalorder %s127, %s141
    %p143 = scmp.eq.s32.totalorder %s19, 0
    %p144 = por %p142, %p143
    %s145 = ssub.s32 %s20, %s32
    %s146 = ssub.s32 %s21, %s28
    %s147 = sor.u32 %s145, %s146
    %p148 = scmp.eq.s32.totalorder %s147, 0
    %s150 = sadd.s32 %s149, 1
    %s151 = scalar_select %p148, %s149, %s150
    %p154 = pneg %p148
    %p155 = scmp.eq.s32.totalorder %s13, 1
    %p156 = por %p154, %p155
    %p157 = scmp.ne.s32.totalorder %s149, %s152
    %p158 = scmp.eq.s32.totalorder %s13, 0
    %p159 = por %p157, %p158
    %p160 = scmp.ne.s32.totalorder %s149, %s152
    %p161 = scmp.eq.s32.totalorder %s18, 1
    %p162 = por %p160, %p161
    %p163 = scmp.ne.s32.totalorder %s152, %s153
    %p164 = scmp.eq.s32.totalorder %s18, 0
    %p165 = por %p163, %p164
    %p166 = scmp.ne.s32.totalorder %s152, %s153
    %p167 = scmp.eq.s32.totalorder %s19, 1
    %p168 = por %p166, %p167
    %p170 = scmp.ne.s32.totalorder %s153, %s169
    %p171 = scmp.eq.s32.totalorder %s19, 0
    %p172 = por %p170, %p171
    %s173 = ssub.s32 %s20, %s32
    %s174 = ssub.s32 %s21, %s28
    %s175 = sor.u32 %s173, %s174
    %p176 = scmp.eq.s32.totalorder %s175, 0
    %s178 = sadd.s32 %s177, 1
    %s179 = scalar_select %p176, %s177, %s178
    %p182 = pneg %p176
    %p183 = scmp.eq.s32.totalorder %s13, 1
    %p184 = por %p182, %p183
    %p185 = scmp.ne.s32.totalorder %s177, %s180
    %p186 = scmp.eq.s32.totalorder %s13, 0
    %p187 = por %p185, %p186
    %p188 = scmp.ne.s32.totalorder %s177, %s180
    %p189 = scmp.eq.s32.totalorder %s18, 1
    %p190 = por %p188, %p189
    %p191 = scmp.ne.s32.totalorder %s180, %s181
    %p192 = scmp.eq.s32.totalorder %s18, 0
    %p193 = por %p191, %p192
    %p194 = scmp.ne.s32.totalorder %s180, %s181
    %p195 = scmp.eq.s32.totalorder %s19, 1
    %p196 = por %p194, %p195
    %p198 = scmp.ne.s32.totalorder %s181, %s197
    %p199 = scmp.eq.s32.totalorder %s19, 0
    %p200 = por %p198, %p199
    %p201 = scmp.le.s32.totalorder 1, %s13
    %p202 = scmp.lt.s32.totalorder %s13, 3
    %p203 = pnand %p201, %p202
    %p204 = pneg %p203
    // Predicated region
    $region9: #{pam_forward.2} parent=5 // pred_check
      _
    $region10: #{pam_forward.2} parent=5 // pred_check_branch
      %206 = sbr.rel (%p203) target = $region12
    $region11: #{pam_forward.2} parent=5 // pred_region
      %s207 = ssub.s32 %s13, 1
      // Predicated region
      $region13: #{pam_forward.2} parent=11 // pred_check
        %p208 = pneg %p74
      $region14: #{pam_forward.2} parent=11 // pred_check_branch
        %210 = sbr.rel (%p208) target = $region16
      $region15: #{pam_forward.2} parent=11 // pred_region
        _
      $region16: #{pam_forward.2} parent=11 // pred_fallthru
        _
      // Predicated region
      $region17: #{pam_forward.2} parent=11 // pred_check
        %p211 = pneg %p95
      $region18: #{pam_forward.2} parent=11 // pred_check_branch
        %213 = sbr.rel (%p211) target = $region20
      $region19: #{pam_forward.2} parent=11 // pred_region
        _
      $region20: #{pam_forward.2} parent=11 // pred_fallthru
        _
      // Predicated region
      $region21: #{pam_forward.2} parent=11 // pred_check
        %p214 = pneg %p116
      $region22: #{pam_forward.2} parent=11 // pred_check_branch
        %216 = sbr.rel (%p214) target = $region24
      $region23: #{pam_forward.2} parent=11 // pred_region
        _
      $region24: #{pam_forward.2} parent=11 // pred_fallthru
        _
      // Predicated region
      $region25: #{pam_forward.2} parent=11 // pred_check
        %p217 = pneg %p137
      $region26: #{pam_forward.2} parent=11 // pred_check_branch
        %219 = sbr.rel (%p217) target = $region28
      $region27: #{pam_forward.2} parent=11 // pred_region
        _
      $region28: #{pam_forward.2} parent=11 // pred_fallthru
        _
    $region12: #{pam_forward.2} parent=5 // pred_fallthru
      _
    %p220 = scmp.lt.s32.totalorder %s13, 2
    // Predicated region
    $region29: #{pam_forward.2} parent=5 // pred_check
      %p221 = pneg %p220
    $region30: #{pam_forward.2} parent=5 // pred_check_branch
      %223 = sbr.rel (%p221) target = $region32
    $region31: #{pam_forward.2} parent=5 // pred_region
      // Predicated region
      $region33: #{pam_forward.2} parent=31 // pred_check
        %p224 = pneg %p47
      $region34: #{pam_forward.2} parent=31 // pred_check_branch
        %226 = sbr.rel (%p224) target = $region36
      $region35: #{pam_forward.2} parent=31 // pred_region
        %s227 = smul.u32 2, %s21
        %p228 = scmp.lt.s32.totalorder %s20, 1
        %s229 = scalar_select %p228, %s20, 1
        %p230 = scmp.lt.s32.totalorder %s227, 1
        %s231 = scalar_select %p230, %s227, 1
        %s232 = smul.addr %s229, 8
        %s233 = sadd.s32 %s231, %s232
        %s234 = smul.addr %s233, 8
        %s235 = scalar_lea.vmem %s0, %s234
        %s236 = smul.u32 2, %s21
      $region36: #{pam_forward.2} parent=31 // pred_fallthru
        _
    $region32: #{pam_forward.2} parent=5 // pred_fallthru
      _
    %p237 = scmp.le.s32.totalorder 1, %s13
    %p238 = scmp.lt.s32.totalorder %s13, 3
    %p239 = pnand %p237, %p238
    %p240 = pneg %p239
    // Predicated region
    $region37: #{pam_forward.2} parent=5 // pred_check
      _
    $region38: #{pam_forward.2} parent=5 // pred_check_branch
      %242 = sbr.rel (%p239) target = $region40
    $region39: #{pam_forward.2} parent=5 // pred_region
      %s243 = ssub.s32 %s13, 1
      %s244 = smul.u32 2, %s23
      %p245 = scmp.lt.s32.totalorder %s22, 1
      %s246 = scalar_select %p245, %s22, 1
      %p247 = scmp.lt.s32.totalorder %s244, 1
      %s248 = scalar_select %p247, %s244, 1
      %s249 = smul.addr %s246, 8
      %s250 = sadd.s32 %s248, %s249
      %s251 = smul.addr %s250, 8
      %s252 = scalar_lea.vmem %s0, %s251
      %p253 = pneg %p53
      %p254 = pneg %p50
      %p255 = pneg %p74
      %p256 = pneg %p71
      %p257 = pneg %p95
      %p258 = pneg %p92
      %p259 = pneg %p116
      %p260 = pneg %p113
      %p261 = pneg %p137
      %p262 = pneg %p134
      %p263 = pneg %p165
      %p264 = pneg %p162
      %p265 = scmp.lt.s32.totalorder %s22, 1
      %s266 = scalar_select %p265, %s22, 1
      %p267 = scmp.lt.s32.totalorder %s23, 0
      %s268 = scalar_select %p267, %s23, 0
      %s269 = smul.addr %s268, 2
      %s270 = smul.addr %s266, 2
      %s271 = sadd.s32 %s269, %s270
      %s272 = smul.addr %s271, 4
      %s273 = scalar_lea.vmem %s5, %s272
      %p274 = pneg %p193
      %p275 = pneg %p190
      %p276 = scmp.lt.s32.totalorder %s22, 1
      %s277 = scalar_select %p276, %s22, 1
      %p278 = scmp.lt.s32.totalorder %s23, 0
      %s279 = scalar_select %p278, %s23, 0
      %s280 = smul.addr %s279, 8
      %s281 = smul.addr %s277, 8
      %s282 = sadd.s32 %s280, %s281
      %s283 = smul.addr %s282, 4
      %s284 = scalar_lea.vmem %s6, %s283
      %s285 = smul.u32 2, %s23
      %p286 = scmp.lt.s32.totalorder %s22, 1
      %s287 = scalar_select %p286, %s22, 1
      %p288 = scmp.lt.s32.totalorder %s285, 1
      %s289 = scalar_select %p288, %s285, 1
      %s290 = smul.addr %s287, 8
      %s291 = sadd.s32 %s289, %s290
      %s292 = smul.addr %s291, 8
      %s293 = scalar_lea.vmem %s0, %s292
      %s294 = smul.u32 2, %s23
      %p295 = scmp.lt.s32.totalorder %s22, 1
      %s296 = scalar_select %p295, %s22, 1
      %p297 = scmp.lt.s32.totalorder %s23, 0
      %s298 = scalar_select %p297, %s23, 0
      %s299 = smul.addr %s298, 2
      %s300 = smul.addr %s296, 2
      %s301 = sadd.s32 %s299, %s300
      %s302 = smul.addr %s301, 4
      %s303 = scalar_lea.vmem %s5, %s302
      %p304 = scmp.lt.s32.totalorder %s22, 1
      %s305 = scalar_select %p304, %s22, 1
      %p306 = scmp.lt.s32.totalorder %s23, 0
      %s307 = scalar_select %p306, %s23, 0
      %s308 = smul.addr %s307, 8
      %s309 = smul.addr %s305, 8
      %s310 = sadd.s32 %s308, %s309
      %s311 = smul.addr %s310, 4
      %s312 = scalar_lea.vmem %s6, %s311
      %v314 = vld [vmem:[%s293] sm:$0xff]
      %v315 = vld [vmem:[%s293 + $0x8] sm:$0xff]
      %v316 = vld [vmem:[%s293 + $0x10] sm:$0xff]
      %v317 = vld [vmem:[%s293 + $0x18] sm:$0xff]
      %v318 = vld [vmem:[%s293 + $0x20] sm:$0xff]
      %v319 = vld [vmem:[%s293 + $0x28] sm:$0xff]
      %v320 = vld [vmem:[%s293 + $0x30] sm:$0xff]
      %v321 = vld [vmem:[%s293 + $0x38] sm:$0xff]
      %v322 = vpack.c.bf16 %v316, %v314
      %v323 = vpack.c.bf16 %v317, %v315
      %v324 = vpack.c.bf16 %v320, %v318
      %v325 = vpack.c.bf16 %v321, %v319
      %v326 = vld [vmem:[%s1] sm:$0xf]
      %v327 = vld [vmem:[%s2] sm:$0xff]
      %329 = vset.pattern.permute.xlu0 0
      %330 = vperm.xlu0 %329, %v327
      %v331 = vpop.permute.xlu0 %330
      %vm333 = vcmask 261120
      %v335 = vsel %vm333, %v326, 0
      %337 = vmatprep.subr.bf16.mxu0 %v323
      %338 = vmatpush1.bf16.msra.mxu0 %v322
      %339 = vmatprep.subr.bf16.mxu0 %v325
      %340 = vmatpush1.bf16.msra.mxu0 %v324
      %341 = vmatprep.subr.bf16.mxu0 0
      %342 = vmatpush1.bf16.msra.mxu0 0
      %343 = vmatprep.subr.bf16.mxu0 0
      %344 = vmatpush1.bf16.msra.mxu0 0
      %345 = vmatprep.subr.bf16.mxu0 0
      %346 = vmatpush1.bf16.msra.mxu0 0
      %347 = vmatprep.subr.bf16.mxu0 0
      %348 = vmatpush1.bf16.msra.mxu0 0
      %349 = vmatprep.subr.bf16.mxu0 0
      %350 = vmatpush1.bf16.msra.mxu0 0
      %351 = vmatprep.subr.bf16.mxu0 0
      %352 = vmatpush1.bf16.msra.mxu0 0
      %353 = vmatprep.subr.bf16.mxu0 0
      %354 = vmatpush1.bf16.msra.mxu0 0
      %355 = vmatprep.subr.bf16.mxu0 0
      %356 = vmatpush1.bf16.msra.mxu0 0
      %357 = vmatprep.subr.bf16.mxu0 0
      %358 = vmatpush1.bf16.msra.mxu0 0
      %359 = vmatprep.subr.bf16.mxu0 0
      %360 = vmatpush1.bf16.msra.mxu0 0
      %361 = vmatprep.subr.bf16.mxu0 0
      %362 = vmatpush1.bf16.msra.mxu0 0
      %363 = vmatprep.subr.bf16.mxu0 0
      %364 = vmatpush1.bf16.msra.mxu0 0
      %365 = vmatprep.subr.bf16.mxu0 0
      %366 = vmatpush1.bf16.msra.mxu0 0
      %367 = vmatprep.subr.bf16.mxu0 0
      %368 = vmatpush1.bf16.msra.mxu0 0
      %369 = vmatprep.mubr.bf16.mxu0 0
      %370 = vmatmul.mubr.bf16.gmra.mrb[0].mxu0 %v335
      %v371 = vpop.f32.mrb[0].mxu0
      %v372 = vadd.f32 %v331, %v371
      %v373 = vpop.f32.mrb[0].mxu0
      %v374 = vadd.f32 %v331, %v373
      %v375 = vpop.f32.mrb[0].mxu0
      %v376 = vpop.f32.mrb[0].mxu0
      %377 = vdwg.mxu0
      %v378 = vld [vmem:[%s3] sm:$0xf]
      %v379 = vld [vmem:[%s3 + $0x4] sm:$0xf]
      %v380 = vld [vmem:[%s3 + $0x8] sm:$0xf]
      %v381 = vld [vmem:[%s3 + $0xc] sm:$0xf]
      %v382 = vld [vmem:[%s4] sm:$0xff]
      %v383 = vld [vmem:[%s4 + $0x8] sm:$0xff]
      %v384 = vld [vmem:[%s4 + $0x10] sm:$0xff]
      %v385 = vld [vmem:[%s4 + $0x18] sm:$0xff]
      %387 = vset.pattern.permute.xlu0 0
      %388 = vperm.xlu0 %387, %v382
      %v389 = vpop.permute.xlu0 %388
      %392 = vset.pattern.permute.xlu0 0
      %393 = vperm.xlu0 %392, %v383
      %v394 = vpop.permute.xlu0 %393
      %397 = vset.pattern.permute.xlu0 0
      %398 = vperm.xlu0 %397, %v384
      %v399 = vpop.permute.xlu0 %398
      %402 = vset.pattern.permute.xlu0 0
      %403 = vperm.xlu0 %402, %v385
      %v404 = vpop.permute.xlu0 %403
      %v410 = vunpack.c.l.b16 %v378
      %v411 = vunpack.c.l.b16 %v379
      %v412 = vunpack.c.l.b16 %v380
      %v413 = vunpack.c.l.b16 %v381
      %v414 = vpack.c.b16 %v411, %v410
      %v415 = vpack.c.b16 %v413, %v412
      %v417 = vsel %vm333, %v414, 0
      %v420 = vsel %vm333, %v415, 0
      %422 = vmatprep.subr.bf16.mxu0 %v323
      %423 = vmatpush1.bf16.msra.mxu0 %v322
      %424 = vmatprep.subr.bf16.mxu0 %v325
      %425 = vmatpush1.bf16.msra.mxu0 %v324
      %426 = vmatprep.subr.bf16.mxu0 0
      %427 = vmatpush1.bf16.msra.mxu0 0
      %428 = vmatprep.subr.bf16.mxu0 0
      %429 = vmatpush1.bf16.msra.mxu0 0
      %430 = vmatprep.subr.bf16.mxu0 0
      %431 = vmatpush1.bf16.msra.mxu0 0
      %432 = vmatprep.subr.bf16.mxu0 0
      %433 = vmatpush1.bf16.msra.mxu0 0
      %434 = vmatprep.subr.bf16.mxu0 0
      %435 = vmatpush1.bf16.msra.mxu0 0
      %436 = vmatprep.subr.bf16.mxu0 0
      %437 = vmatpush1.bf16.msra.mxu0 0
      %438 = vmatprep.subr.bf16.mxu0 0
      %439 = vmatpush1.bf16.msra.mxu0 0
      %440 = vmatprep.subr.bf16.mxu0 0
      %441 = vmatpush1.bf16.msra.mxu0 0
      %442 = vmatprep.subr.bf16.mxu0 0
      %443 = vmatpush1.bf16.msra.mxu0 0
      %444 = vmatprep.subr.bf16.mxu0 0
      %445 = vmatpush1.bf16.msra.mxu0 0
      %446 = vmatprep.subr.bf16.mxu0 0
      %447 = vmatpush1.bf16.msra.mxu0 0
      %448 = vmatprep.subr.bf16.mxu0 0
      %449 = vmatpush1.bf16.msra.mxu0 0
      %450 = vmatprep.subr.bf16.mxu0 0
      %451 = vmatpush1.bf16.msra.mxu0 0
      %452 = vmatprep.subr.bf16.mxu0 0
      %453 = vmatpush1.bf16.msra.mxu0 0
      %454 = vmatprep.mubr.bf16.mxu0 0
      %455 = vmatmul.mubr.bf16.gmra.mrb[0].mxu0 %v417
      %v456 = vpop.f32.mrb[0].mxu0
      %v457 = vadd.f32 %v389, %v456
      %v458 = vpop.f32.mrb[0].mxu0
      %v459 = vadd.f32 %v389, %v458
      %v460 = vpop.f32.mrb[0].mxu0
      %v461 = vadd.f32 %v394, %v460
      %v462 = vpop.f32.mrb[0].mxu0
      %v463 = vadd.f32 %v394, %v462
      %464 = vmatprep.mubr.bf16.mxu0 0
      %465 = vmatmul.mubr.bf16.gmra.mrb[0].mxu0 %v420
      %v466 = vpop.f32.mrb[0].mxu0
      %v467 = vadd.f32 %v399, %v466
      %v468 = vpop.f32.mrb[0].mxu0
      %v469 = vadd.f32 %v399, %v468
      %v470 = vpop.f32.mrb[0].mxu0
      %v471 = vadd.f32 %v404, %v470
      %v472 = vpop.f32.mrb[0].mxu0
      %v473 = vadd.f32 %v404, %v472
      %474 = vdwg.mxu0
      %v475 = vpack.c.bf16 %v372, %v372
      %v476 = vpack.c.bf16 %v374, %v374
      %v479 = vunpack.c.l.b16 %v475
      %v480 = vunpack.c.l.b16 %v476
      %v481 = vpack.c.b16 %v480, %v479
      %483 = vst [vmem:[%s303] sm:$0xff] %v481
      %v484 = vpack.c.bf16 %v461, %v457
      %v485 = vpack.c.bf16 %v463, %v459
      %v486 = vpack.c.bf16 %v471, %v467
      %v487 = vpack.c.bf16 %v473, %v469
      %v492 = vunpack.c.l.b16 %v484
      %v493 = vunpack.c.l.b16 %v485
      %v494 = vunpack.c.h.b16 %v484
      %v495 = vunpack.c.h.b16 %v485
      %v496 = vunpack.c.l.b16 %v486
      %v497 = vunpack.c.l.b16 %v487
      %v498 = vunpack.c.h.b16 %v486
      %v499 = vunpack.c.h.b16 %v487
      %v500 = vpack.c.b16 %v493, %v492
      %v501 = vpack.c.b16 %v495, %v494
      %v502 = vpack.c.b16 %v497, %v496
      %v503 = vpack.c.b16 %v499, %v498
      %508 = vst [vmem:[%s312] sm:$0xff] %v500
      %509 = vst [vmem:[%s312 + $0x8] sm:$0xff] %v501
      %510 = vst [vmem:[%s312 + $0x10] sm:$0xff] %v502
      %511 = vst [vmem:[%s312 + $0x18] sm:$0xff] %v503
      %p512 = scmp.lt.s32.totalorder %s22, 1
      %s513 = scalar_select %p512, %s22, 1
      %p514 = scmp.lt.s32.totalorder %s23, 0
      %s515 = scalar_select %p514, %s23, 0
      %s516 = smul.addr %s515, 2
      %s517 = smul.addr %s513, 2
      %s518 = sadd.s32 %s516, %s517
      %s519 = smul.addr %s518, 4
      %s520 = scalar_lea.vmem %s5, %s519
      %p521 = scmp.lt.s32.totalorder %s22, 1
      %s522 = scalar_select %p521, %s22, 1
      %p523 = scmp.lt.s32.totalorder %s23, 0
      %s524 = scalar_select %p523, %s23, 0
      %s525 = smul.addr %s524, 8
      %s526 = smul.addr %s522, 8
      %s527 = sadd.s32 %s525, %s526
      %s528 = smul.addr %s527, 4
      %s529 = scalar_lea.vmem %s6, %s528
      // Predicated region
      $region41: #{pam_forward.2} parent=39 // pred_check
        %p530 = pneg %p162
      $region42: #{pam_forward.2} parent=39 // pred_check_branch
        %532 = sbr.rel (%p530) target = $region44
      $region43: #{pam_forward.2} parent=39 // pred_region
        _
      $region44: #{pam_forward.2} parent=39 // pred_fallthru
        _
      // Predicated region
      $region45: #{pam_forward.2} parent=39 // pred_check
        %p533 = pneg %p190
      $region46: #{pam_forward.2} parent=39 // pred_check_branch
        %535 = sbr.rel (%p533) target = $region48
      $region47: #{pam_forward.2} parent=39 // pred_region
        _
      $region48: #{pam_forward.2} parent=39 // pred_fallthru
        _
    $region40: #{pam_forward.2} parent=5 // pred_fallthru
      _
    %p536 = scmp.le.s32.totalorder 2, %s13
    // Predicated region
    $region49: #{pam_forward.2} parent=5 // pred_check
      %p537 = pneg %p536
    $region50: #{pam_forward.2} parent=5 // pred_check_branch
      %539 = sbr.rel (%p537) target = $region52
    $region51: #{pam_forward.2} parent=5 // pred_region
      %s540 = ssub.s32 %s13, 2
      // Predicated region
      $region53: #{pam_forward.2} parent=51 // pred_check
        %p541 = pneg %p168
      $region54: #{pam_forward.2} parent=51 // pred_check_branch
        %543 = sbr.rel (%p541) target = $region56
      $region55: #{pam_forward.2} parent=51 // pred_region
        %p544 = scmp.lt.s32.totalorder %s24, 1
        %s545 = scalar_select %p544, %s24, 1
        %p546 = scmp.lt.s32.totalorder %s25, 0
        %s547 = scalar_select %p546, %s25, 0
        %s548 = smul.addr %s547, 2
        %s549 = smul.addr %s545, 2
        %s550 = sadd.s32 %s548, %s549
        %s551 = smul.addr %s550, 4
        %s552 = scalar_lea.vmem %s5, %s551
      $region56: #{pam_forward.2} parent=51 // pred_fallthru
        _
      // Predicated region
      $region57: #{pam_forward.2} parent=51 // pred_check
        %p553 = pneg %p196
      $region58: #{pam_forward.2} parent=51 // pred_check_branch
        %555 = sbr.rel (%p553) target = $region60
      $region59: #{pam_forward.2} parent=51 // pred_region
        %p556 = scmp.lt.s32.totalorder %s24, 1
        %s557 = scalar_select %p556, %s24, 1
        %p558 = scmp.lt.s32.totalorder %s25, 0
        %s559 = scalar_select %p558, %s25, 0
        %s560 = smul.addr %s559, 8
        %s561 = smul.addr %s557, 8
        %s562 = sadd.s32 %s560, %s561
        %s563 = smul.addr %s562, 4
        %s564 = scalar_lea.vmem %s6, %s563
      $region60: #{pam_forward.2} parent=51 // pred_fallthru
        _
    $region52: #{pam_forward.2} parent=5 // pred_fallthru
      _
  $region6: #{pam_forward.2} parent=0 // loop_footer
    %s17 = sadd.s32 1, %s13
  $region7: #{pam_forward.2} parent=0 // loop_footer_branch
    %12 = sbr.rel target = $region3
  $region8: #{pam_forward.2} parent=0 // loop_exit
    _

// kernel: pam_forward.3
$region0: #{pam_forward.3}
  #allocation0 [shape = 'u32[]', space=smem, size = 0x4, offset = 0x4, fixed_abs, tag = 'smem constant byte address 0x4 - core index']
  #allocation1 [shape = 'u32[144,128]{1,0:T(1,128)}', space=vmem, size = 0x12000, scoped, tag = 'internal scratch']
  #allocation2 [shape = 'f32[1,128]{1,0:T(1,128)}', space=vmem, size = 0x200, scoped, tag = 'scratch operand']
  #allocation3 [shape = 'f32[1,128]{1,0:T(1,128)}', space=vmem, size = 0x200, scoped, tag = 'scratch operand']
  #allocation4 [shape = 'f32[32,128]{1,0:T(8,128)}', space=vmem, size = 0x4000, scoped, tag = 'scratch operand']
  #allocation5 [shape = 'f32[1,1]{1,0:T(1,128)S(6)}', space=smem, size = 0x200, scoped, tag = 'scoped memory for pam_forward.3']
  %s0 = inlined_call_operand.vmem [shape: f32[2,32,256], index: 0, kind: input, shape index: {}]
  %s1 = inlined_call_operand.vmem [shape: bf16[8,32], index: 1, kind: input, shape index: {}]
  %s2 = inlined_call_operand.vmem [shape: f32[8,1], index: 2, kind: input, shape index: {}]
  %s3 = inlined_call_operand.vmem [shape: bf16[2,1,8,256], index: 3, kind: input, shape index: {}]
  %s4 = inlined_call_operand.vmem [shape: bf16[2,1,32,256], index: 4, kind: input, shape index: {}]
  %s5 = inlined_call_operand.<no memory space> [shape: f32[1,1], index: 5, kind: input, shape index: {}]
  %s6 = inlined_call_operand.vmem [shape: f32[2,32,256], index: 6, kind: output, shape index: {}]
  %s7 = sld [smem:[#allocation0]]
  $region129: #{pam_forward.3} parent=0
    _
  %s9 = ssub.s32 1, %s7
  %s10 = scalar_select 0, %s9, %s7
  %11 = sst [smem:[#allocation5]] %s5
  $region1: #{pam_forward.3} parent=0
    #allocation6 [shape = 'u8[32768]{0}', space=vmem, size = 0x8000, scoped, tag = 'input window, operand 0']
    #allocation7 [shape = 'u8[32768]{0}', space=vmem, size = 0x8000, scoped, tag = 'output window, operand 0']
    loop: start=0, step=1, limit=6
    $region2: #{pam_forward.3} parent=1 // loop_pre_header
      _
    $region3: #{pam_forward.3} parent=1 // loop_header
      %s13 = sphi 0, %s17
      %p14 = scmp.ge.s32.totalorder %s13, 6
      %s20 = sphi 0, %s32
      %s21 = sphi 0, %s28
      %s22 = sphi 0, %s20
      %s23 = sphi 0, %s21
      %s24 = sphi 0, %s22
      %s25 = sphi 0, %s23
      %s37 = sphi 0, %s39
      %s40 = sphi 0, %s37
      %s41 = sphi 0, %s40
      %s57 = sphi 0, %s41
      %s61 = sphi 0, %s61
      %s63 = sphi 0, %s61
      %s64 = sphi 0, %s63
      %s78 = sphi 0, %s64
      %s82 = sphi 0, %s82
      %s84 = sphi 0, %s82
      %s85 = sphi 0, %s84
      %s99 = sphi 0, %s85
      %s105 = sphi 0, %s107
      %s108 = sphi 0, %s105
      %s109 = sphi 0, %s108
      %s125 = sphi 0, %s109
      %s131 = sphi 0, %s133
      %s134 = sphi 0, %s131
      %s135 = sphi 0, %s134
      %s151 = sphi 0, %s135
      %s155 = sphi 0, %s155
      %s157 = sphi 0, %s155
      %s158 = sphi 0, %s157
      %s172 = sphi 0, %s158
      %s180 = sphi 0, %s182
      %s183 = sphi 0, %s180
      %s184 = sphi 0, %s183
      %s200 = sphi 0, %s184
    $region4: #{pam_forward.3} parent=1 // loop_header_branch
      %16 = sbr.rel (%p14) target = $region8
    $region5: #{pam_forward.3} parent=1 // loop_body
      %s18 = ssub.s32 %s13, 1
      %s19 = ssub.s32 %s13, 2
      %s26 = sadd.s32 1, %s21
      %p27 = scmp.ge.s32.totalorder %s26, 2
      %s28 = scalar_select %p27, 0, %s26
      %s29 = sadd.s32 1, %s20
      %s30 = scalar_select %p27, %s29, %s20
      %p31 = scmp.ge.s32.totalorder %s30, 2
      %s32 = scalar_select %p31, 0, %s30
      %s33 = ssub.s32 %s20, %s32
      %s34 = ssub.s32 %s21, %s28
      %s35 = sor.u32 %s33, %s34
      %p36 = scmp.eq.s32.totalorder %s35, 0
      %s38 = sadd.s32 %s37, 1
      %s39 = scalar_select %p36, %s37, %s38
      %p42 = pneg %p36
      %p43 = scmp.eq.s32.totalorder %s13, 3
      %p44 = por %p42, %p43
      %p45 = scmp.ne.s32.totalorder %s37, %s40
      %p46 = scmp.eq.s32.totalorder %s13, 0
      %p47 = por %p45, %p46
      %p48 = scmp.ne.s32.totalorder %s37, %s40
      %p49 = scmp.eq.s32.totalorder %s18, 3
      %p50 = por %p48, %p49
      %p51 = scmp.ne.s32.totalorder %s40, %s41
      %p52 = scmp.eq.s32.totalorder %s18, 0
      %p53 = por %p51, %p52
      %p54 = scmp.ne.s32.totalorder %s40, %s41
      %p55 = scmp.eq.s32.totalorder %s19, 3
      %p56 = por %p54, %p55
      %p58 = scmp.ne.s32.totalorder %s41, %s57
      %p59 = scmp.eq.s32.totalorder %s19, 0
      %p60 = por %p58, %p59
      %s62 = sadd.s32 %s61, 1
      %p65 = scmp.eq.s32.totalorder %s13, 3
      %p66 = scmp.ne.s32.totalorder %s61, %s63
      %p67 = scmp.eq.s32.totalorder %s13, 0
      %p68 = por %p66, %p67
      %p69 = scmp.ne.s32.totalorder %s61, %s63
      %p70 = scmp.eq.s32.totalorder %s18, 3
      %p71 = por %p69, %p70
      %p72 = scmp.ne.s32.totalorder %s63, %s64
      %p73 = scmp.eq.s32.totalorder %s18, 0
      %p74 = por %p72, %p73
      %p75 = scmp.ne.s32.totalorder %s63, %s64
      %p76 = scmp.eq.s32.totalorder %s19, 3
      %p77 = por %p75, %p76
      %p79 = scmp.ne.s32.totalorder %s64, %s78
      %p80 = scmp.eq.s32.totalorder %s19, 0
      %p81 = por %p79, %p80
      %s83 = sadd.s32 %s82, 1
      %p86 = scmp.eq.s32.totalorder %s13, 3
      %p87 = scmp.ne.s32.totalorder %s82, %s84
      %p88 = scmp.eq.s32.totalorder %s13, 0
      %p89 = por %p87, %p88
      %p90 = scmp.ne.s32.totalorder %s82, %s84
      %p91 = scmp.eq.s32.totalorder %s18, 3
      %p92 = por %p90, %p91
      %p93 = scmp.ne.s32.totalorder %s84, %s85
      %p94 = scmp.eq.s32.totalorder %s18, 0
      %p95 = por %p93, %p94
      %p96 = scmp.ne.s32.totalorder %s84, %s85
      %p97 = scmp.eq.s32.totalorder %s19, 3
      %p98 = por %p96, %p97
      %p100 = scmp.ne.s32.totalorder %s85, %s99
      %p101 = scmp.eq.s32.totalorder %s19, 0
      %p102 = por %p100, %p101
      %s103 = ssub.s32 %s20, %s32
      %p104 = scmp.eq.s32.totalorder %s103, 0
      %s106 = sadd.s32 %s105, 1
      %s107 = scalar_select %p104, %s105, %s106
      %p110 = pneg %p104
      %p111 = scmp.eq.s32.totalorder %s13, 3
      %p112 = por %p110, %p111
      %p113 = scmp.ne.s32.totalorder %s105, %s108
      %p114 = scmp.eq.s32.totalorder %s13, 0
      %p115 = por %p113, %p114
      %p116 = scmp.ne.s32.totalorder %s105, %s108
      %p117 = scmp.eq.s32.totalorder %s18, 3
      %p118 = por %p116, %p117
      %p119 = scmp.ne.s32.totalorder %s108, %s109
      %p120 = scmp.eq.s32.totalorder %s18, 0
      %p121 = por %p119, %p120
      %p122 = scmp.ne.s32.totalorder %s108, %s109
      %p123 = scmp.eq.s32.totalorder %s19, 3
      %p124 = por %p122, %p123
      %p126 = scmp.ne.s32.totalorder %s109, %s125
      %p127 = scmp.eq.s32.totalorder %s19, 0
      %p128 = por %p126, %p127
      %s129 = ssub.s32 %s20, %s32
      %p130 = scmp.eq.s32.totalorder %s129, 0
      %s132 = sadd.s32 %s131, 1
      %s133 = scalar_select %p130, %s131, %s132
      %p136 = pneg %p130
      %p137 = scmp.eq.s32.totalorder %s13, 3
      %p138 = por %p136, %p137
      %p139 = scmp.ne.s32.totalorder %s131, %s134
      %p140 = scmp.eq.s32.totalorder %s13, 0
      %p141 = por %p139, %p140
      %p142 = scmp.ne.s32.totalorder %s131, %s134
      %p143 = scmp.eq.s32.totalorder %s18, 3
      %p144 = por %p142, %p143
      %p145 = scmp.ne.s32.totalorder %s134, %s135
      %p146 = scmp.eq.s32.totalorder %s18, 0
      %p147 = por %p145, %p146
      %p148 = scmp.ne.s32.totalorder %s134, %s135
      %p149 = scmp.eq.s32.totalorder %s19, 3
      %p150 = por %p148, %p149
      %p152 = scmp.ne.s32.totalorder %s135, %s151
      %p153 = scmp.eq.s32.totalorder %s19, 0
      %p154 = por %p152, %p153
      %s156 = sadd.s32 %s155, 1
      %p159 = scmp.eq.s32.totalorder %s13, 3
      %p160 = scmp.ne.s32.totalorder %s155, %s157
      %p161 = scmp.eq.s32.totalorder %s13, 0
      %p162 = por %p160, %p161
      %p163 = scmp.ne.s32.totalorder %s155, %s157
      %p164 = scmp.eq.s32.totalorder %s18, 3
      %p165 = por %p163, %p164
      %p166 = scmp.ne.s32.totalorder %s157, %s158
      %p167 = scmp.eq.s32.totalorder %s18, 0
      %p168 = por %p166, %p167
      %p169 = scmp.ne.s32.totalorder %s157, %s158
      %p170 = scmp.eq.s32.totalorder %s19, 3
      %p171 = por %p169, %p170
      %p173 = scmp.ne.s32.totalorder %s158, %s172
      %p174 = scmp.eq.s32.totalorder %s19, 0
      %p175 = por %p173, %p174
      %s176 = ssub.s32 %s20, %s32
      %s177 = ssub.s32 %s21, %s28
      %s178 = sor.u32 %s176, %s177
      %p179 = scmp.eq.s32.totalorder %s178, 0
      %s181 = sadd.s32 %s180, 1
      %s182 = scalar_select %p179, %s180, %s181
      %p185 = pneg %p179
      %p186 = scmp.eq.s32.totalorder %s13, 3
      %p187 = por %p185, %p186
      %p188 = scmp.ne.s32.totalorder %s180, %s183
      %p189 = scmp.eq.s32.totalorder %s13, 0
      %p190 = por %p188, %p189
      %p191 = scmp.ne.s32.totalorder %s180, %s183
      %p192 = scmp.eq.s32.totalorder %s18, 3
      %p193 = por %p191, %p192
      %p194 = scmp.ne.s32.totalorder %s183, %s184
      %p195 = scmp.eq.s32.totalorder %s18, 0
      %p196 = por %p194, %p195
      %p197 = scmp.ne.s32.totalorder %s183, %s184
      %p198 = scmp.eq.s32.totalorder %s19, 3
      %p199 = por %p197, %p198
      %p201 = scmp.ne.s32.totalorder %s184, %s200
      %p202 = scmp.eq.s32.totalorder %s19, 0
      %p203 = por %p201, %p202
      %p204 = scmp.le.s32.totalorder 1, %s13
      %p205 = scmp.lt.s32.totalorder %s13, 5
      %p206 = pnand %p204, %p205
      %p207 = pneg %p206
      // Predicated region
      $region9: #{pam_forward.3} parent=5 // pred_check
        _
      $region10: #{pam_forward.3} parent=5 // pred_check_branch
        %209 = sbr.rel (%p206) target = $region12
      $region11: #{pam_forward.3} parent=5 // pred_region
        %s210 = ssub.s32 %s13, 1
        // Predicated region
        $region13: #{pam_forward.3} parent=11 // pred_check
          %p211 = pneg %p74
        $region14: #{pam_forward.3} parent=11 // pred_check_branch
          %213 = sbr.rel (%p211) target = $region16
        $region15: #{pam_forward.3} parent=11 // pred_region
          _
        $region16: #{pam_forward.3} parent=11 // pred_fallthru
          _
        // Predicated region
        $region17: #{pam_forward.3} parent=11 // pred_check
          %p214 = pneg %p95
        $region18: #{pam_forward.3} parent=11 // pred_check_branch
          %216 = sbr.rel (%p214) target = $region20
        $region19: #{pam_forward.3} parent=11 // pred_region
          _
        $region20: #{pam_forward.3} parent=11 // pred_fallthru
          _
        // Predicated region
        $region21: #{pam_forward.3} parent=11 // pred_check
          %p217 = pneg %p168
        $region22: #{pam_forward.3} parent=11 // pred_check_branch
          %219 = sbr.rel (%p217) target = $region24
        $region23: #{pam_forward.3} parent=11 // pred_region
          _
        $region24: #{pam_forward.3} parent=11 // pred_fallthru
          _
      $region12: #{pam_forward.3} parent=5 // pred_fallthru
        _
      %p220 = scmp.lt.s32.totalorder %s13, 4
      // Predicated region
      $region25: #{pam_forward.3} parent=5 // pred_check
        %p221 = pneg %p220
      $region26: #{pam_forward.3} parent=5 // pred_check_branch
        %223 = sbr.rel (%p221) target = $region28
      $region27: #{pam_forward.3} parent=5 // pred_region
        // Predicated region
        $region29: #{pam_forward.3} parent=27 // pred_check
          %p224 = pneg %p47
        $region30: #{pam_forward.3} parent=27 // pred_check_branch
          %226 = sbr.rel (%p224) target = $region32
        $region31: #{pam_forward.3} parent=27 // pred_region
          %s227 = sand.u32 %s37, 1
          %s228 = sand.u32 %s37, 1
          %s229 = smul.addr %s228, 32
          %s230 = scalar_lea.vmem [#allocation6], %s229
          %s231 = smul.addr %s20, 8
          %s232 = sadd.s32 %s21, %s231
          %s233 = smul.addr %s232, 8
          %s234 = scalar_lea.vmem %s0, %s233
          // Predicated region
          $region33: #{pam_forward.3} parent=31 // pred_check
            _
          $region34: #{pam_forward.3} parent=31 // pred_check_branch
            %236 = sbr.rel (0) target = $region36
          $region35: #{pam_forward.3} parent=31 // pred_region
            // Predicated region
            $region37: #{pam_forward.3} parent=35 // pred_check
              _
            $region38: #{pam_forward.3} parent=35 // pred_check_branch
              %238 = sbr.rel (0) target = $region40
            $region39: #{pam_forward.3} parent=35 // pred_region
              // Predicated region
              $region52: #{pam_forward.3} parent=39 // pred_check
                _
              $region53: #{pam_forward.3} parent=39 // pred_check_branch
                %259 = sbr.rel (0) target = $region55
              $region54: #{pam_forward.3} parent=39 // pred_region
                loop: start=0, step=1, limit=1
                $region56: #{pam_forward.3} parent=54 // loop_pre_header
                  _
                $region57: #{pam_forward.3} parent=54 // loop_header
                  %s261 = sphi 0, %s265
                  %p262 = scmp.ge.s32.totalorder %s261, 1
                  %s266 = sphi %s234, %s234
                  %s267 = sphi %s230, %s230
                $region58: #{pam_forward.3} parent=54 // loop_header_branch
                  %264 = sbr.rel (%p262) target = $region62
                $region59: #{pam_forward.3} parent=54 // loop_body
                  %v268 = vld [vmem:[%s266] sm:$0xff]
                  %269 = vst [vmem:[%s267] sm:$0xff] %v268
                  %v270 = vld [vmem:[%s266 + $0x10] sm:$0xff]
                  %271 = vst [vmem:[%s267 + $0x8] sm:$0xff] %v270
                  %v272 = vld [vmem:[%s266 + $0x20] sm:$0xff]
                  %273 = vst [vmem:[%s267 + $0x10] sm:$0xff] %v272
                  %v274 = vld [vmem:[%s266 + $0x30] sm:$0xff]
                  %275 = vst [vmem:[%s267 + $0x18] sm:$0xff] %v274
                $region60: #{pam_forward.3} parent=54 // loop_footer
                  %s265 = sadd.s32 1, %s261
                $region61: #{pam_forward.3} parent=54 // loop_footer_branch
                  %260 = sbr.rel target = $region57
                $region62: #{pam_forward.3} parent=54 // loop_exit
                  _
              $region55: #{pam_forward.3} parent=39 // pred_fallthru
                _
              // Predicated region
              $region63: #{pam_forward.3} parent=39 // pred_check
                _
              $region64: #{pam_forward.3} parent=39 // pred_check_branch
                %277 = sbr.rel target = $region66
              $region65: #{pam_forward.3} parent=39 // pred_region
                _
              $region66: #{pam_forward.3} parent=39 // pred_fallthru
                _
            $region40: #{pam_forward.3} parent=35 // pred_fallthru
              _
            // Predicated region
            $region41: #{pam_forward.3} parent=35 // pred_check
              _
            $region42: #{pam_forward.3} parent=35 // pred_check_branch
              %240 = sbr.rel target = $region44
            $region43: #{pam_forward.3} parent=35 // pred_region
              loop: start=0, step=1, limit=1
              $region45: #{pam_forward.3} parent=43 // loop_pre_header
                _
              $region46: #{pam_forward.3} parent=43 // loop_header
                %s243 = sphi 0, %s247
                %p244 = scmp.ge.s32.totalorder %s243, 1
                %s248 = sphi %s234, %s234
                %s249 = sphi %s230, %s230
              $region47: #{pam_forward.3} parent=43 // loop_header_branch
                %246 = sbr.rel (%p244) target = $region51
              $region48: #{pam_forward.3} parent=43 // loop_body
                %v250 = vld [vmem:[%s248] sm:$0xff]
                %251 = vst [vmem:[%s249] sm:$0xff] %v250
                %v252 = vld [vmem:[%s248 + $0x10] sm:$0xff]
                %253 = vst [vmem:[%s249 + $0x8] sm:$0xff] %v252
                %v254 = vld [vmem:[%s248 + $0x20] sm:$0xff]
                %255 = vst [vmem:[%s249 + $0x10] sm:$0xff] %v254
                %v256 = vld [vmem:[%s248 + $0x30] sm:$0xff]
                %257 = vst [vmem:[%s249 + $0x18] sm:$0xff] %v256
              $region49: #{pam_forward.3} parent=43 // loop_footer
                %s247 = sadd.s32 1, %s243
              $region50: #{pam_forward.3} parent=43 // loop_footer_branch
                %242 = sbr.rel target = $region46
              $region51: #{pam_forward.3} parent=43 // loop_exit
                _
            $region44: #{pam_forward.3} parent=35 // pred_fallthru
              _
          $region36: #{pam_forward.3} parent=31 // pred_fallthru
            _
          %278 = vnop
        $region32: #{pam_forward.3} parent=27 // pred_fallthru
          _
        // Predicated region
        $region67: #{pam_forward.3} parent=27 // pred_check
          %p279 = pneg %p115
        $region68: #{pam_forward.3} parent=27 // pred_check_branch
          %281 = sbr.rel (%p279) target = $region70
        $region69: #{pam_forward.3} parent=27 // pred_region
          %p282 = scmp.lt.s32.totalorder %s20, 1
          %s283 = scalar_select %p282, %s20, 1
          %s284 = smul.addr %s283, 2
          %s285 = smul.addr %s284, 4
          %s286 = scalar_lea.vmem %s3, %s285
        $region70: #{pam_forward.3} parent=27 // pred_fallthru
          _
        // Predicated region
        $region71: #{pam_forward.3} parent=27 // pred_check
          %p287 = pneg %p141
        $region72: #{pam_forward.3} parent=27 // pred_check_branch
          %289 = sbr.rel (%p287) target = $region74
        $region73: #{pam_forward.3} parent=27 // pred_region
          %p290 = scmp.lt.s32.totalorder %s20, 1
          %s291 = scalar_select %p290, %s20, 1
          %s292 = smul.addr %s291, 8
          %s293 = smul.addr %s292, 4
          %s294 = scalar_lea.vmem %s4, %s293
        $region74: #{pam_forward.3} parent=27 // pred_fallthru
          _
      $region28: #{pam_forward.3} parent=5 // pred_fallthru
        _
      %p295 = scmp.le.s32.totalorder 1, %s13
      %p296 = scmp.lt.s32.totalorder %s13, 5
      %p297 = pnand %p295, %p296
      %p298 = pneg %p297
      // Predicated region
      $region75: #{pam_forward.3} parent=5 // pred_check
        _
      $region76: #{pam_forward.3} parent=5 // pred_check_branch
        %300 = sbr.rel (%p297) target = $region78
      $region77: #{pam_forward.3} parent=5 // pred_region
        %s301 = ssub.s32 %s13, 1
        %s302 = sand.u32 %s40, 1
        %s303 = sand.u32 %s40, 1
        %s304 = smul.addr %s303, 32
        %s305 = scalar_lea.vmem [#allocation6], %s304
        // Predicated region
        $region79: #{pam_forward.3} parent=77 // pred_check
          %p306 = pneg %p53
        $region80: #{pam_forward.3} parent=77 // pred_check_branch
          %308 = sbr.rel (%p306) target = $region82
        $region81: #{pam_forward.3} parent=77 // pred_region
          _
        $region82: #{pam_forward.3} parent=77 // pred_fallthru
          _
        %s309 = sand.u32 %s40, 1
        %s310 = sand.u32 %s40, 1
        %s311 = smul.addr %s310, 32
        %s312 = scalar_lea.vmem [#allocation6], %s311
        %p313 = pneg %p53
        %p314 = pneg %p50
        %p315 = pneg %p74
        %p316 = pneg %p71
        %p317 = pneg %p95
        %p318 = pneg %p92
        %p319 = scmp.lt.s32.totalorder %s22, 1
        %s320 = scalar_select %p319, %s22, 1
        %s321 = smul.addr %s320, 2
        %s322 = smul.addr %s321, 4
        %s323 = scalar_lea.vmem %s3, %s322
        %p324 = pneg %p121
        %p325 = pneg %p118
        %p326 = scmp.lt.s32.totalorder %s22, 1
        %s327 = scalar_select %p326, %s22, 1
        %s328 = smul.addr %s327, 8
        %s329 = smul.addr %s328, 4
        %s330 = scalar_lea.vmem %s4, %s329
        %p331 = pneg %p147
        %p332 = pneg %p144
        %p333 = pneg %p168
        %p334 = pneg %p165
        %p335 = pneg %p196
        %p336 = pneg %p193
        %s337 = sand.u32 %s183, 1
        %s338 = sand.u32 %s183, 1
        %s339 = smul.addr %s338, 32
        %s340 = scalar_lea.vmem [#allocation7], %s339
        %p341 = scmp.lt.s32.totalorder %s22, 1
        %s342 = scalar_select %p341, %s22, 1
        %s343 = smul.addr %s342, 2
        %s344 = smul.addr %s343, 4
        %s345 = scalar_lea.vmem %s3, %s344
        %p346 = scmp.lt.s32.totalorder %s22, 1
        %s347 = scalar_select %p346, %s22, 1
        %s348 = smul.addr %s347, 8
        %s349 = smul.addr %s348, 4
        %s350 = scalar_lea.vmem %s4, %s349
        %v352 = vld [vmem:[%s1] sm:$0xf]
        %v353 = vld [vmem:[%s305] sm:$0xff]
        %v354 = vld [vmem:[%s305 + $0x8] sm:$0xff]
        %v355 = vld [vmem:[%s305 + $0x10] sm:$0xff]
        %v356 = vld [vmem:[%s305 + $0x18] sm:$0xff]
        %v357 = vpack.c.bf16 %v354, %v353
        %v358 = vpack.c.bf16 %v356, %v355
        %v359 = vld [vmem:[%s2] sm:$0xff]
        %361 = vset.pattern.permute.xlu0 0
        %362 = vperm.xlu0 %361, %v359
        %v363 = vpop.permute.xlu0 %362
        %vm365 = vcmask 261120
        %v367 = vsel %vm365, %v352, 0
        %369 = vmatprep.subr.bf16.mxu0 0
        %370 = vmatpush1.bf16.msra.mxu0 %v357
        %371 = vmatprep.subr.bf16.mxu0 0
        %372 = vmatpush1.bf16.msra.mxu0 %v358
        %373 = vmatprep.subr.bf16.mxu0 0
        %374 = vmatpush1.bf16.msra.mxu0 0
        %375 = vmatprep.subr.bf16.mxu0 0
        %376 = vmatpush1.bf16.msra.mxu0 0
        %377 = vmatprep.subr.bf16.mxu0 0
        %378 = vmatpush1.bf16.msra.mxu0 0
        %379 = vmatprep.subr.bf16.mxu0 0
        %380 = vmatpush1.bf16.msra.mxu0 0
        %381 = vmatprep.subr.bf16.mxu0 0
        %382 = vmatpush1.bf16.msra.mxu0 0
        %383 = vmatprep.subr.bf16.mxu0 0
        %384 = vmatpush1.bf16.msra.mxu0 0
        %385 = vmatprep.subr.bf16.mxu0 0
        %386 = vmatpush1.bf16.msra.mxu0 0
        %387 = vmatprep.subr.bf16.mxu0 0
        %388 = vmatpush1.bf16.msra.mxu0 0
        %389 = vmatprep.subr.bf16.mxu0 0
        %390 = vmatpush1.bf16.msra.mxu0 0
        %391 = vmatprep.subr.bf16.mxu0 0
        %392 = vmatpush1.bf16.msra.mxu0 0
        %393 = vmatprep.subr.bf16.mxu0 0
        %394 = vmatpush1.bf16.msra.mxu0 0
        %395 = vmatprep.subr.bf16.mxu0 0
        %396 = vmatpush1.bf16.msra.mxu0 0
        %397 = vmatprep.subr.bf16.mxu0 0
        %398 = vmatpush1.bf16.msra.mxu0 0
        %399 = vmatprep.subr.bf16.mxu0 0
        %400 = vmatpush1.bf16.msra.mxu0 0
        %401 = vmatprep.mubr.bf16.mxu0 0
        %402 = vmatmul.mubr.bf16.gmra.mrb[0].mxu0 %v367
        %v403 = vpop.f32.mrb[0].mxu0
        %v404 = vadd.f32 %v363, %v403
        %v405 = vpop.f32.mrb[0].mxu0
        %v406 = vpop.f32.mrb[0].mxu0
        %v407 = vpop.f32.mrb[0].mxu0
        %408 = vdwg.mxu0
        %v409 = vpack.c.bf16 %v404, %v404
        %410 = vst [vmem:[#allocation2] sm:$0x1] -inf
        %411 = vst [vmem:[#allocation3] sm:$0x1] 0.0
        %412 = vst [vmem:[#allocation4] sm:$0xff] 0.0
        %413 = vst [vmem:[#allocation4 + $0x8] sm:$0xff] 0.0
        %414 = vst [vmem:[#allocation4 + $0x10] sm:$0xff] 0.0
        %415 = vst [vmem:[#allocation4 + $0x18] sm:$0xff] 0.0
        %v416 = vld [vmem:[%s345] sm:$0xff]
        %v417 = vld [vmem:[%s350] sm:$0xff]
        %v418 = vld [vmem:[%s350 + $0x8] sm:$0xff]
        %v419 = vld [vmem:[%s350 + $0x10] sm:$0xff]
        %v420 = vld [vmem:[%s350 + $0x18] sm:$0xff]
        %v422 = vunpack.c.l.b16 %v416
        %v423 = vunpack.c.h.b16 %v416
        %v424 = vpack.c.b16 %v422, %v422
        %v425 = vpack.c.b16 %v423, %v423
        %428 = vxpose.xlu0.c.b16.start [1/8] %v424, 128
        %429 = vxpose.xlu0.c.b16.cont [2/8] 0, 128
        %430 = vxpose.xlu0.c.b16.cont [3/8] 0, 128
        %431 = vxpose.xlu0.c.b16.cont [4/8] 0, 128
        %432 = vxpose.xlu0.c.b16.cont [5/8] 0, 128
        %433 = vxpose.xlu0.c.b16.cont [6/8] 0, 128
        %434 = vxpose.xlu0.c.b16.cont [7/8] 0, 128
        %435 = vxpose.xlu0.c.b16.end [8/8] 0, 128
        %v436 = vpop.trf.xlu0
        %v437 = vpop.trf.xlu0
        %v438 = vpop.trf.xlu0
        %v439 = vpop.trf.xlu0
        %v440 = vpop.trf.xlu0
        %v441 = vpop.trf.xlu0
        %v442 = vpop.trf.xlu0
        %v443 = vpop.trf.xlu0
        %444 = vxpose.xlu0.c.b16.start [1/8] %v425, 128
        %445 = vxpose.xlu0.c.b16.cont [2/8] 0, 128
        %446 = vxpose.xlu0.c.b16.cont [3/8] 0, 128
        %447 = vxpose.xlu0.c.b16.cont [4/8] 0, 128
        %448 = vxpose.xlu0.c.b16.cont [5/8] 0, 128
        %449 = vxpose.xlu0.c.b16.cont [6/8] 0, 128
        %450 = vxpose.xlu0.c.b16.cont [7/8] 0, 128
        %451 = vxpose.xlu0.c.b16.end [8/8] 0, 128
        %v452 = vpop.trf.xlu0
        %v453 = vpop.trf.xlu0
        %v454 = vpop.trf.xlu0
        %v455 = vpop.trf.xlu0
        %v456 = vpop.trf.xlu0
        %v457 = vpop.trf.xlu0
        %v458 = vpop.trf.xlu0
        %v459 = vpop.trf.xlu0
        %vm460 = vcmask 64512
        %v462 = vsel %vm460, %v436, 0
        %v465 = vsel %vm460, %v437, 0
        %v468 = vsel %vm460, %v438, 0
        %v471 = vsel %vm460, %v439, 0
        %v474 = vsel %vm460, %v440, 0
        %v477 = vsel %vm460, %v441, 0
        %v480 = vsel %vm460, %v442, 0
        %v483 = vsel %vm460, %v443, 0
        %v486 = vsel %vm460, %v452, 0
        %v489 = vsel %vm460, %v453, 0
        %v492 = vsel %vm460, %v454, 0
        %v495 = vsel %vm460, %v455, 0
        %v498 = vsel %vm460, %v456, 0
        %v501 = vsel %vm460, %v457, 0
        %v504 = vsel %vm460, %v458, 0
        %v507 = vsel %vm460, %v459, 0
        %vm509 = vcmask 1043456
        %v511 = vsel %vm509, %v409, 0
        %513 = vmatprep.subr.bf16.mxu0 0
        %514 = vmatpush1.bf16.msra.mxu0 %v511
        %515 = vmatprep.subr.bf16.mxu0 0
        %516 = vmatpush1.bf16.msra.mxu0 0
        %517 = vmatprep.subr.bf16.mxu0 0
        %518 = vmatpush1.bf16.msra.mxu0 0
        %519 = vmatprep.subr.bf16.mxu0 0
        %520 = vmatpush1.bf16.msra.mxu0 0
        %521 = vmatprep.subr.bf16.mxu0 0
        %522 = vmatpush1.bf16.msra.mxu0 0
        %523 = vmatprep.subr.bf16.mxu0 0
        %524 = vmatpush1.bf16.msra.mxu0 0
        %525 = vmatprep.subr.bf16.mxu0 0
        %526 = vmatpush1.bf16.msra.mxu0 0
        %527 = vmatprep.subr.bf16.mxu0 0
        %528 = vmatpush1.bf16.msra.mxu0 0
        %529 = vmatprep.subr.bf16.mxu0 0
        %530 = vmatpush1.bf16.msra.mxu0 0
        %531 = vmatprep.subr.bf16.mxu0 0
        %532 = vmatpush1.bf16.msra.mxu0 0
        %533 = vmatprep.subr.bf16.mxu0 0
        %534 = vmatpush1.bf16.msra.mxu0 0
        %535 = vmatprep.subr.bf16.mxu0 0
        %536 = vmatpush1.bf16.msra.mxu0 0
        %537 = vmatprep.subr.bf16.mxu0 0
        %538 = vmatpush1.bf16.msra.mxu0 0
        %539 = vmatprep.subr.bf16.mxu0 0
        %540 = vmatpush1.bf16.msra.mxu0 0
        %541 = vmatprep.subr.bf16.mxu0 0
        %542 = vmatpush1.bf16.msra.mxu0 0
        %543 = vmatprep.subr.bf16.mxu0 0
        %544 = vmatpush1.bf16.msra.mxu0 0
        %545 = vmatprep.mubr.bf16.mxu0 0
        %546 = vmatmul.mubr.bf16.gmra.mrb[0].mxu0 %v462
        %v547 = vpop.f32.mrb[0].mxu0
        %v548 = vadd.f32 0.0, %v547
        %v549 = vpop.f32.mrb[0].mxu0
        %v550 = vpop.f32.mrb[0].mxu0
        %v551 = vadd.f32 0.0, %v550
        %v552 = vpop.f32.mrb[0].mxu0
        %553 = vmatprep.mubr.bf16.mxu0 0
        %554 = vmatmul.mubr.bf16.gmra.mrb[0].mxu0 %v465
        %v555 = vpop.f32.mrb[0].mxu0
        %v556 = vadd.f32 0.0, %v555
        %v557 = vpop.f32.mrb[0].mxu0
        %v558 = vpop.f32.mrb[0].mxu0
        %v559 = vadd.f32 0.0, %v558
        %v560 = vpop.f32.mrb[0].mxu0
        %561 = vmatprep.mubr.bf16.mxu0 0
        %562 = vmatmul.mubr.bf16.gmra.mrb[0].mxu0 %v468
        %v563 = vpop.f32.mrb[0].mxu0
        %v564 = vadd.f32 0.0, %v563
        %v565 = vpop.f32.mrb[0].mxu0
        %v566 = vpop.f32.mrb[0].mxu0
        %v567 = vadd.f32 0.0, %v566
        %v568 = vpop.f32.mrb[0].mxu0
        %569 = vmatprep.mubr.bf16.mxu0 0
        %570 = vmatmul.mubr.bf16.gmra.mrb[0].mxu0 %v471
        %v571 = vpop.f32.mrb[0].mxu0
        %v572 = vadd.f32 0.0, %v571
        %v573 = vpop.f32.mrb[0].mxu0
        %v574 = vpop.f32.mrb[0].mxu0
        %v575 = vadd.f32 0.0, %v574
        %v576 = vpop.f32.mrb[0].mxu0
        %577 = vmatprep.mubr.bf16.mxu0 0
        %578 = vmatmul.mubr.bf16.gmra.mrb[0].mxu0 %v474
        %v579 = vpop.f32.mrb[0].mxu0
        %v580 = vadd.f32 0.0, %v579
        %v581 = vpop.f32.mrb[0].mxu0
        %v582 = vpop.f32.mrb[0].mxu0
        %v583 = vadd.f32 0.0, %v582
        %v584 = vpop.f32.mrb[0].mxu0
        %585 = vmatprep.mubr.bf16.mxu0 0
        %586 = vmatmul.mubr.bf16.gmra.mrb[0].mxu0 %v477
        %v587 = vpop.f32.mrb[0].mxu0
        %v588 = vadd.f32 0.0, %v587
        %v589 = vpop.f32.mrb[0].mxu0
        %v590 = vpop.f32.mrb[0].mxu0
        %v591 = vadd.f32 0.0, %v590
        %v592 = vpop.f32.mrb[0].mxu0
        %593 = vmatprep.mubr.bf16.mxu0 0
        %594 = vmatmul.mubr.bf16.gmra.mrb[0].mxu0 %v480
        %v595 = vpop.f32.mrb[0].mxu0
        %v596 = vadd.f32 0.0, %v595
        %v597 = vpop.f32.mrb[0].mxu0
        %v598 = vpop.f32.mrb[0].mxu0
        %v599 = vadd.f32 0.0, %v598
        %v600 = vpop.f32.mrb[0].mxu0
        %601 = vmatprep.mubr.bf16.mxu0 0
        %602 = vmatmul.mubr.bf16.gmra.mrb[0].mxu0 %v483
        %v603 = vpop.f32.mrb[0].mxu0
        %v604 = vadd.f32 0.0, %v603
        %v605 = vpop.f32.mrb[0].mxu0
        %v606 = vpop.f32.mrb[0].mxu0
        %v607 = vadd.f32 0.0, %v606
        %v608 = vpop.f32.mrb[0].mxu0
        %609 = vmatprep.mubr.bf16.mxu0 0
        %610 = vmatmul.mubr.bf16.gmra.mrb[0].mxu0 %v486
        %v611 = vpop.f32.mrb[0].mxu0
        %v612 = vadd.f32 0.0, %v611
        %v613 = vpop.f32.mrb[0].mxu0
        %v614 = vpop.f32.mrb[0].mxu0
        %v615 = vadd.f32 0.0, %v614
        %v616 = vpop.f32.mrb[0].mxu0
        %617 = vmatprep.mubr.bf16.mxu0 0
        %618 = vmatmul.mubr.bf16.gmra.mrb[0].mxu0 %v489
        %v619 = vpop.f32.mrb[0].mxu0
        %v620 = vadd.f32 0.0, %v619
        %v621 = vpop.f32.mrb[0].mxu0
        %v622 = vpop.f32.mrb[0].mxu0
        %v623 = vadd.f32 0.0, %v622
        %v624 = vpop.f32.mrb[0].mxu0
        %625 = vmatprep.mubr.bf16.mxu0 0
        %626 = vmatmul.mubr.bf16.gmra.mrb[0].mxu0 %v492
        %v627 = vpop.f32.mrb[0].mxu0
        %v628 = vadd.f32 0.0, %v627
        %v629 = vpop.f32.mrb[0].mxu0
        %v630 = vpop.f32.mrb[0].mxu0
        %v631 = vadd.f32 0.0, %v630
        %v632 = vpop.f32.mrb[0].mxu0
        %633 = vmatprep.mubr.bf16.mxu0 0
        %634 = vmatmul.mubr.bf16.gmra.mrb[0].mxu0 %v495
        %v635 = vpop.f32.mrb[0].mxu0
        %v636 = vadd.f32 0.0, %v635
        %v637 = vpop.f32.mrb[0].mxu0
        %v638 = vpop.f32.mrb[0].mxu0
        %v639 = vadd.f32 0.0, %v638
        %v640 = vpop.f32.mrb[0].mxu0
        %641 = vmatprep.mubr.bf16.mxu0 0
        %642 = vmatmul.mubr.bf16.gmra.mrb[0].mxu0 %v498
        %v643 = vpop.f32.mrb[0].mxu0
        %v644 = vadd.f32 0.0, %v643
        %v645 = vpop.f32.mrb[0].mxu0
        %v646 = vpop.f32.mrb[0].mxu0
        %v647 = vadd.f32 0.0, %v646
        %v648 = vpop.f32.mrb[0].mxu0
        %649 = vmatprep.mubr.bf16.mxu0 0
        %650 = vmatmul.mubr.bf16.gmra.mrb[0].mxu0 %v501
        %v651 = vpop.f32.mrb[0].mxu0
        %v652 = vadd.f32 0.0, %v651
        %v653 = vpop.f32.mrb[0].mxu0
        %v654 = vpop.f32.mrb[0].mxu0
        %v655 = vadd.f32 0.0, %v654
        %v656 = vpop.f32.mrb[0].mxu0
        %657 = vmatprep.mubr.bf16.mxu0 0
        %658 = vmatmul.mubr.bf16.gmra.mrb[0].mxu0 %v504
        %v659 = vpop.f32.mrb[0].mxu0
        %v660 = vadd.f32 0.0, %v659
        %v661 = vpop.f32.mrb[0].mxu0
        %v662 = vpop.f32.mrb[0].mxu0
        %v663 = vadd.f32 0.0, %v662
        %v664 = vpop.f32.mrb[0].mxu0
        %665 = vmatprep.mubr.bf16.mxu0 0
        %666 = vmatmul.mubr.bf16.gmra.mrb[0].mxu0 %v507
        %v667 = vpop.f32.mrb[0].mxu0
        %v668 = vadd.f32 0.0, %v667
        %v669 = vpop.f32.mrb[0].mxu0
        %v670 = vpop.f32.mrb[0].mxu0
        %v671 = vadd.f32 0.0, %v670
        %v672 = vpop.f32.mrb[0].mxu0
        %673 = vdwg.mxu0
        %v674 = vld [vmem:[#allocation2] sm:$0x1]
        %v675 = vmax.f32 %v548, %v564
        %v676 = vmax.f32 %v551, %v567
        %v677 = vmax.f32 %v556, %v572
        %v678 = vmax.f32 %v559, %v575
        %v679 = vmax.f32 %v675, %v580
        %v680 = vmax.f32 %v676, %v583
        %v681 = vmax.f32 %v677, %v588
        %v682 = vmax.f32 %v678, %v591
        %v683 = vmax.f32 %v679, %v596
        %v684 = vmax.f32 %v680, %v599
        %v685 = vmax.f32 %v681, %v604
        %v686 = vmax.f32 %v682, %v607
        %v687 = vmax.f32 %v683, %v612
        %v688 = vmax.f32 %v684, %v615
        %v689 = vmax.f32 %v685, %v620
        %v690 = vmax.f32 %v686, %v623
        %v691 = vmax.f32 %v687, %v628
        %v692 = vmax.f32 %v688, %v631
        %v693 = vmax.f32 %v689, %v636
        %v694 = vmax.f32 %v690, %v639
        %v695 = vmax.f32 %v691, %v644
        %v696 = vmax.f32 %v692, %v647
        %v697 = vmax.f32 %v693, %v652
        %v698 = vmax.f32 %v694, %v655
        %v699 = vmax.f32 %v695, %v660
        %v700 = vmax.f32 %v696, %v663
        %v701 = vmax.f32 %v697, %v668
        %v702 = vmax.f32 %v698, %v671
        %v703 = vmax.f32 %v699, %v700
        %v704 = vmax.f32 %v701, %v702
        %v705 = vmax.f32 %v703, %v704
        %v706 = vrot.slane %v705, 4
        %v707 = vmax.f32 %v705, %v706
        %v708 = vrot.slane %v707, 2
        %v709 = vmax.f32 %v707, %v708
        %v710 = vrot.slane %v709, 1
        %v711 = vmax.f32 %v709, %v710
        %v712 = vmax.f32 %v674, %v711
        %v713 = vsub.f32 %v674, %v712
        %v714 = vmul.f32 %v713, 1.442695
        %v715 = vpow.pop %v714
        %v717 = vlaneseq
        %v718 = vshrl.u32 %v717, 7
        %v719 = vsub.s32 0, %v718
        %v720 = vrot.slane %v712, %v719
        %v722 = vsub.f32 %v548, %v720
        %v723 = vsub.f32 %v551, %v720
        %v724 = vsub.f32 %v556, %v720
        %v725 = vsub.f32 %v559, %v720
        %v726 = vsub.f32 %v564, %v720
        %v727 = vsub.f32 %v567, %v720
        %v728 = vsub.f32 %v572, %v720
        %v729 = vsub.f32 %v575, %v720
        %v730 = vsub.f32 %v580, %v720
        %v731 = vsub.f32 %v583, %v720
        %v732 = vsub.f32 %v588, %v720
        %v733 = vsub.f32 %v591, %v720
        %v734 = vsub.f32 %v596, %v720
        %v735 = vsub.f32 %v599, %v720
        %v736 = vsub.f32 %v604, %v720
        %v737 = vsub.f32 %v607, %v720
        %v738 = vsub.f32 %v612, %v720
        %v739 = vsub.f32 %v615, %v720
        %v740 = vsub.f32 %v620, %v720
        %v741 = vsub.f32 %v623, %v720
        %v742 = vsub.f32 %v628, %v720
        %v743 = vsub.f32 %v631, %v720
        %v744 = vsub.f32 %v636, %v720
        %v745 = vsub.f32 %v639, %v720
        %v746 = vsub.f32 %v644, %v720
        %v747 = vsub.f32 %v647, %v720
        %v748 = vsub.f32 %v652, %v720
        %v749 = vsub.f32 %v655, %v720
        %v750 = vsub.f32 %v660, %v720
        %v751 = vsub.f32 %v663, %v720
        %v752 = vsub.f32 %v668, %v720
        %v753 = vsub.f32 %v671, %v720
        %v754 = vmul.f32 %v722, 1.442695
        %v755 = vpow.pop %v754
        %v756 = vmul.f32 %v723, 1.442695
        %v757 = vpow.pop %v756
        %v758 = vmul.f32 %v724, 1.442695
        %v759 = vpow.pop %v758
        %v760 = vmul.f32 %v725, 1.442695
        %v761 = vpow.pop %v760
        %v762 = vmul.f32 %v726, 1.442695
        %v763 = vpow.pop %v762
        %v764 = vmul.f32 %v727, 1.442695
        %v765 = vpow.pop %v764
        %v766 = vmul.f32 %v728, 1.442695
        %v767 = vpow.pop %v766
        %v768 = vmul.f32 %v729, 1.442695
        %v769 = vpow.pop %v768
        %v770 = vmul.f32 %v730, 1.442695
        %v771 = vpow.pop %v770
        %v772 = vmul.f32 %v731, 1.442695
        %v773 = vpow.pop %v772
        %v774 = vmul.f32 %v732, 1.442695
        %v775 = vpow.pop %v774
        %v776 = vmul.f32 %v733, 1.442695
        %v777 = vpow.pop %v776
        %v778 = vmul.f32 %v734, 1.442695
        %v779 = vpow.pop %v778
        %v780 = vmul.f32 %v735, 1.442695
        %v781 = vpow.pop %v780
        %v782 = vmul.f32 %v736, 1.442695
        %v783 = vpow.pop %v782
        %v784 = vmul.f32 %v737, 1.442695
        %v785 = vpow.pop %v784
        %v786 = vmul.f32 %v738, 1.442695
        %v787 = vpow.pop %v786
        %v788 = vmul.f32 %v739, 1.442695
        %v789 = vpow.pop %v788
        %v790 = vmul.f32 %v740, 1.442695
        %v791 = vpow.pop %v790
        %v792 = vmul.f32 %v741, 1.442695
        %v793 = vpow.pop %v792
        %v794 = vmul.f32 %v742, 1.442695
        %v795 = vpow.pop %v794
        %v796 = vmul.f32 %v743, 1.442695
        %v797 = vpow.pop %v796
        %v798 = vmul.f32 %v744, 1.442695
        %v799 = vpow.pop %v798
        %v800 = vmul.f32 %v745, 1.442695
        %v801 = vpow.pop %v800
        %v802 = vmul.f32 %v746, 1.442695
        %v803 = vpow.pop %v802
        %v804 = vmul.f32 %v747, 1.442695
        %v805 = vpow.pop %v804
        %v806 = vmul.f32 %v748, 1.442695
        %v807 = vpow.pop %v806
        %v808 = vmul.f32 %v749, 1.442695
        %v809 = vpow.pop %v808
        %v810 = vmul.f32 %v750, 1.442695
        %v811 = vpow.pop %v810
        %v812 = vmul.f32 %v751, 1.442695
        %v813 = vpow.pop %v812
        %v814 = vmul.f32 %v752, 1.442695
        %v815 = vpow.pop %v814
        %v816 = vmul.f32 %v753, 1.442695
        %v817 = vpow.pop %v816
        %v818 = vld [vmem:[#allocation3] sm:$0x1]
        %v819 = vmul.f32 %v715, %v818
        %v820 = vadd.f32 %v755, %v757
        %v821 = vadd.f32 %v820, %v759
        %v822 = vadd.f32 %v821, %v761
        %v823 = vadd.f32 %v822, %v763
        %v824 = vadd.f32 %v823, %v765
        %v825 = vadd.f32 %v824, %v767
        %v826 = vadd.f32 %v825, %v769
        %v827 = vadd.f32 %v826, %v771
        %v828 = vadd.f32 %v827, %v773
        %v829 = vadd.f32 %v828, %v775
        %v830 = vadd.f32 %v829, %v777
        %v831 = vadd.f32 %v830, %v779
        %v832 = vadd.f32 %v831, %v781
        %v833 = vadd.f32 %v832, %v783
        %v834 = vadd.f32 %v833, %v785
        %v835 = vadd.f32 %v834, %v787
        %v836 = vadd.f32 %v835, %v789
        %v837 = vadd.f32 %v836, %v791
        %v838 = vadd.f32 %v837, %v793
        %v839 = vadd.f32 %v838, %v795
        %v840 = vadd.f32 %v839, %v797
        %v841 = vadd.f32 %v840, %v799
        %v842 = vadd.f32 %v841, %v801
        %v843 = vadd.f32 %v842, %v803
        %v844 = vadd.f32 %v843, %v805
        %v845 = vadd.f32 %v844, %v807
        %v846 = vadd.f32 %v845, %v809
        %v847 = vadd.f32 %v846, %v811
        %v848 = vadd.f32 %v847, %v813
        %v849 = vadd.f32 %v848, %v815
        %v850 = vadd.f32 %v849, %v817
        %v851 = vrot.slane %v850, 4
        %v852 = vadd.f32 %v850, %v851
        %v853 = vrot.slane %v852, 2
        %v854 = vadd.f32 %v852, %v853
        %v855 = vrot.slane %v854, 1
        %v856 = vadd.f32 %v854, %v855
        %v857 = vadd.f32 %v819, %v856
        %858 = vst [vmem:[#allocation3] sm:$0x1] %v857
        %v859 = vpack.c.bf16 %v757, %v755
        %v860 = vpack.c.bf16 %v761, %v759
        %v861 = vpack.c.bf16 %v765, %v763
        %v862 = vpack.c.bf16 %v769, %v767
        %v863 = vpack.c.bf16 %v773, %v771
        %v864 = vpack.c.bf16 %v777, %v775
        %v865 = vpack.c.bf16 %v781, %v779
        %v866 = vpack.c.bf16 %v785, %v783
        %v867 = vpack.c.bf16 %v789, %v787
        %v868 = vpack.c.bf16 %v793, %v791
        %v869 = vpack.c.bf16 %v797, %v795
        %v870 = vpack.c.bf16 %v801, %v799
        %v871 = vpack.c.bf16 %v805, %v803
        %v872 = vpack.c.bf16 %v809, %v807
        %v873 = vpack.c.bf16 %v813, %v811
        %v874 = vpack.c.bf16 %v817, %v815
        %v875 = vld [vmem:[#allocation4] sm:$0xff]
        %v876 = vld [vmem:[#allocation4 + $0x8] sm:$0xff]
        %v877 = vld [vmem:[#allocation4 + $0x10] sm:$0xff]
        %v878 = vld [vmem:[#allocation4 + $0x18] sm:$0xff]
        %v880 = vlaneseq
        %v881 = vshrl.u32 %v880, 7
        %v882 = vsub.s32 0, %v881
        %v883 = vrot.slane %v715, %v882
        %v885 = vmul.f32 %v883, %v875
        %v886 = vmul.f32 %v883, %v876
        %v887 = vmul.f32 %v883, %v877
        %v888 = vmul.f32 %v883, %v878
        %v893 = vunpack.c.l.b16 %v417
        %v894 = vunpack.c.h.b16 %v417
        %v895 = vunpack.c.l.b16 %v418
        %v896 = vunpack.c.h.b16 %v418
        %v897 = vunpack.c.l.b16 %v419
        %v898 = vunpack.c.h.b16 %v419
        %v899 = vunpack.c.l.b16 %v420
        %v900 = vunpack.c.h.b16 %v420
        %v901 = vpack.c.b16 %v895, %v893
        %v902 = vpack.c.b16 %v896, %v894
        %v903 = vpack.c.b16 %v899, %v897
        %v904 = vpack.c.b16 %v900, %v898
        %909 = vmatprep.subr.bf16.mxu0 0
        %910 = vmatpush1.bf16.msra.mxu0 %v859
        %911 = vmatprep.subr.bf16.mxu0 0
        %912 = vmatpush1.bf16.msra.mxu0 %v860
        %913 = vmatprep.subr.bf16.mxu0 0
        %914 = vmatpush1.bf16.msra.mxu0 %v861
        %915 = vmatprep.subr.bf16.mxu0 0
        %916 = vmatpush1.bf16.msra.mxu0 %v862
        %917 = vmatprep.subr.bf16.mxu0 0
        %918 = vmatpush1.bf16.msra.mxu0 %v863
        %919 = vmatprep.subr.bf16.mxu0 0
        %920 = vmatpush1.bf16.msra.mxu0 %v864
        %921 = vmatprep.subr.bf16.mxu0 0
        %922 = vmatpush1.bf16.msra.mxu0 %v865
        %923 = vmatprep.subr.bf16.mxu0 0
        %924 = vmatpush1.bf16.msra.mxu0 %v866
        %925 = vmatprep.subr.bf16.mxu0 0
        %926 = vmatpush1.bf16.msra.mxu0 %v867
        %927 = vmatprep.subr.bf16.mxu0 0
        %928 = vmatpush1.bf16.msra.mxu0 %v868
        %929 = vmatprep.subr.bf16.mxu0 0
        %930 = vmatpush1.bf16.msra.mxu0 %v869
        %931 = vmatprep.subr.bf16.mxu0 0
        %932 = vmatpush1.bf16.msra.mxu0 %v870
        %933 = vmatprep.subr.bf16.mxu0 0
        %934 = vmatpush1.bf16.msra.mxu0 %v871
        %935 = vmatprep.subr.bf16.mxu0 0
        %936 = vmatpush1.bf16.msra.mxu0 %v872
        %937 = vmatprep.subr.bf16.mxu0 0
        %938 = vmatpush1.bf16.msra.mxu0 %v873
        %939 = vmatprep.subr.bf16.mxu0 0
        %940 = vmatpush1.bf16.msra.mxu0 %v874
        %941 = vmatprep.mubr.bf16.mxu0 %v902
        %942 = vmatmul.mubr.bf16.gmra.mrb[0].mxu0 %v901
        %v943 = vpop.f32.mrb[0].mxu0
        %v944 = vadd.f32 0.0, %v943
        %v945 = vpop.f32.mrb[0].mxu0
        %v946 = vpop.f32.mrb[0].mxu0
        %v947 = vadd.f32 0.0, %v946
        %v948 = vpop.f32.mrb[0].mxu0
        %949 = vmatprep.mubr.bf16.mxu0 %v904
        %950 = vmatmul.mubr.bf16.gmra.mrb[0].mxu0 %v903
        %v951 = vpop.f32.mrb[0].mxu0
        %v952 = vadd.f32 0.0, %v951
        %v953 = vpop.f32.mrb[0].mxu0
        %v954 = vpop.f32.mrb[0].mxu0
        %v955 = vadd.f32 0.0, %v954
        %v956 = vpop.f32.mrb[0].mxu0
        %957 = vdwg.mxu0
        %v958 = vadd.f32 %v885, %v944
        %v959 = vadd.f32 %v886, %v947
        %v960 = vadd.f32 %v887, %v952
        %v961 = vadd.f32 %v888, %v955
        %962 = vst [vmem:[#allocation4] sm:$0xff] %v958
        %963 = vst [vmem:[#allocation4 + $0x8] sm:$0xff] %v959
        %964 = vst [vmem:[#allocation4 + $0x10] sm:$0xff] %v960
        %965 = vst [vmem:[#allocation4 + $0x18] sm:$0xff] %v961
        %966 = vst [vmem:[#allocation2] sm:$0x1] %v712
        %s967 = sld [smem:[#allocation5]]
        %v968 = vld [vmem:[#allocation3] sm:$0x1]
        %v969 = vrcp.pop %v968
        %v970 = vstv %s967
        %v971 = vmul.f32 %v970, %v969
        %v972 = vld [vmem:[#allocation4] sm:$0xff]
        %v973 = vld [vmem:[#allocation4 + $0x8] sm:$0xff]
        %v974 = vld [vmem:[#allocation4 + $0x10] sm:$0xff]
        %v975 = vld [vmem:[#allocation4 + $0x18] sm:$0xff]
        %v977 = vlaneseq
        %v978 = vshrl.u32 %v977, 7
        %v979 = vsub.s32 0, %v978
        %v980 = vrot.slane %v971, %v979
        %v982 = vmul.f32 %v972, %v980
        %v983 = vmul.f32 %v973, %v980
        %v984 = vmul.f32 %v974, %v980
        %v985 = vmul.f32 %v975, %v980
        %v986 = vld [vmem:[%s305] sm:$0xff]
        %v987 = vld [vmem:[%s305 + $0x8] sm:$0xff]
        %v988 = vld [vmem:[%s305 + $0x10] sm:$0xff]
        %v989 = vld [vmem:[%s305 + $0x18] sm:$0xff]
        %v990 = vadd.f32 %v982, %v986
        %v991 = vadd.f32 %v983, %v987
        %v992 = vadd.f32 %v984, %v988
        %v993 = vadd.f32 %v985, %v989
        %994 = vst [vmem:[%s340] sm:$0xff] %v990
        %995 = vst [vmem:[%s340 + $0x8] sm:$0xff] %v991
        %996 = vst [vmem:[%s340 + $0x10] sm:$0xff] %v992
        %997 = vst [vmem:[%s340 + $0x18] sm:$0xff] %v993
        %s998 = sand.u32 %s183, 1
        %s999 = sand.u32 %s183, 1
        %s1000 = smul.addr %s999, 32
        %s1001 = scalar_lea.vmem [#allocation7], %s1000
        // Predicated region
        $region83: #{pam_forward.3} parent=77 // pred_check
          %p1002 = pneg %p193
        $region84: #{pam_forward.3} parent=77 // pred_check_branch
          %1004 = sbr.rel (%p1002) target = $region86
        $region85: #{pam_forward.3} parent=77 // pred_region
          %s1005 = smul.addr %s22, 8
          %s1006 = sadd.s32 %s23, %s1005
          %s1007 = smul.addr %s1006, 8
          %s1008 = scalar_lea.vmem %s6, %s1007
          // Predicated region
          $region87: #{pam_forward.3} parent=85 // pred_check
            _
          $region88: #{pam_forward.3} parent=85 // pred_check_branch
            %1010 = sbr.rel (0) target = $region90
          $region89: #{pam_forward.3} parent=85 // pred_region
            // Predicated region
            $region91: #{pam_forward.3} parent=89 // pred_check
              _
            $region92: #{pam_forward.3} parent=89 // pred_check_branch
              %1012 = sbr.rel (0) target = $region94
            $region93: #{pam_forward.3} parent=89 // pred_region
              // Predicated region
              $region106: #{pam_forward.3} parent=93 // pred_check
                _
              $region107: #{pam_forward.3} parent=93 // pred_check_branch
                %1033 = sbr.rel (0) target = $region109
              $region108: #{pam_forward.3} parent=93 // pred_region
                loop: start=0, step=1, limit=1
                $region110: #{pam_forward.3} parent=108 // loop_pre_header
                  _
                $region111: #{pam_forward.3} parent=108 // loop_header
                  %s1035 = sphi 0, %s1039
                  %p1036 = scmp.ge.s32.totalorder %s1035, 1
                  %s1040 = sphi %s1001, %s1001
                  %s1041 = sphi %s1008, %s1008
                $region112: #{pam_forward.3} parent=108 // loop_header_branch
                  %1038 = sbr.rel (%p1036) target = $region116
                $region113: #{pam_forward.3} parent=108 // loop_body
                  %v1042 = vld [vmem:[%s1040] sm:$0xff]
                  %1043 = vst [vmem:[%s1041] sm:$0xff] %v1042
                  %v1044 = vld [vmem:[%s1040 + $0x8] sm:$0xff]
                  %1045 = vst [vmem:[%s1041 + $0x10] sm:$0xff] %v1044
                  %v1046 = vld [vmem:[%s1040 + $0x10] sm:$0xff]
                  %1047 = vst [vmem:[%s1041 + $0x20] sm:$0xff] %v1046
                  %v1048 = vld [vmem:[%s1040 + $0x18] sm:$0xff]
                  %1049 = vst [vmem:[%s1041 + $0x30] sm:$0xff] %v1048
                $region114: #{pam_forward.3} parent=108 // loop_footer
                  %s1039 = sadd.s32 1, %s1035
                $region115: #{pam_forward.3} parent=108 // loop_footer_branch
                  %1034 = sbr.rel target = $region111
                $region116: #{pam_forward.3} parent=108 // loop_exit
                  _
              $region109: #{pam_forward.3} parent=93 // pred_fallthru
                _
              // Predicated region
              $region117: #{pam_forward.3} parent=93 // pred_check
                _
              $region118: #{pam_forward.3} parent=93 // pred_check_branch
                %1051 = sbr.rel target = $region120
              $region119: #{pam_forward.3} parent=93 // pred_region
                _
              $region120: #{pam_forward.3} parent=93 // pred_fallthru
                _
            $region94: #{pam_forward.3} parent=89 // pred_fallthru
              _
            // Predicated region
            $region95: #{pam_forward.3} parent=89 // pred_check
              _
            $region96: #{pam_forward.3} parent=89 // pred_check_branch
              %1014 = sbr.rel target = $region98
            $region97: #{pam_forward.3} parent=89 // pred_region
              loop: start=0, step=1, limit=1
              $region99: #{pam_forward.3} parent=97 // loop_pre_header
                _
              $region100: #{pam_forward.3} parent=97 // loop_header
                %s1017 = sphi 0, %s1021
                %p1018 = scmp.ge.s32.totalorder %s1017, 1
                %s1022 = sphi %s1001, %s1001
                %s1023 = sphi %s1008, %s1008
              $region101: #{pam_forward.3} parent=97 // loop_header_branch
                %1020 = sbr.rel (%p1018) target = $region105
              $region102: #{pam_forward.3} parent=97 // loop_body
                %v1024 = vld [vmem:[%s1022] sm:$0xff]
                %1025 = vst [vmem:[%s1023] sm:$0xff] %v1024
                %v1026 = vld [vmem:[%s1022 + $0x8] sm:$0xff]
                %1027 = vst [vmem:[%s1023 + $0x10] sm:$0xff] %v1026
                %v1028 = vld [vmem:[%s1022 + $0x10] sm:$0xff]
                %1029 = vst [vmem:[%s1023 + $0x20] sm:$0xff] %v1028
                %v1030 = vld [vmem:[%s1022 + $0x18] sm:$0xff]
                %1031 = vst [vmem:[%s1023 + $0x30] sm:$0xff] %v1030
              $region103: #{pam_forward.3} parent=97 // loop_footer
                %s1021 = sadd.s32 1, %s1017
              $region104: #{pam_forward.3} parent=97 // loop_footer_branch
                %1016 = sbr.rel target = $region100
              $region105: #{pam_forward.3} parent=97 // loop_exit
                _
            $region98: #{pam_forward.3} parent=89 // pred_fallthru
              _
          $region90: #{pam_forward.3} parent=85 // pred_fallthru
            _
          %1052 = vnop
        $region86: #{pam_forward.3} parent=77 // pred_fallthru
          _
      $region78: #{pam_forward.3} parent=5 // pred_fallthru
        _
      %p1053 = scmp.le.s32.totalorder 2, %s13
      // Predicated region
      $region121: #{pam_forward.3} parent=5 // pred_check
        %p1054 = pneg %p1053
      $region122: #{pam_forward.3} parent=5 // pred_check_branch
        %1056 = sbr.rel (%p1054) target = $region124
      $region123: #{pam_forward.3} parent=5 // pred_region
        %s1057 = ssub.s32 %s13, 2
        // Predicated region
        $region125: #{pam_forward.3} parent=123 // pred_check
          %p1058 = pneg %p199
        $region126: #{pam_forward.3} parent=123 // pred_check_branch
          %1060 = sbr.rel (%p1058) target = $region128
        $region127: #{pam_forward.3} parent=123 // pred_region
          %s1061 = sand.u32 %s184, 1
          %s1062 = sand.u32 %s184, 1
          %s1063 = smul.addr %s1062, 32
          %s1064 = scalar_lea.vmem [#allocation7], %s1063
        $region128: #{pam_forward.3} parent=123 // pred_fallthru
          _
      $region124: #{pam_forward.3} parent=5 // pred_fallthru
        _
    $region6: #{pam_forward.3} parent=1 // loop_footer
      %s17 = sadd.s32 1, %s13
    $region7: #{pam_forward.3} parent=1 // loop_footer_branch
      %12 = sbr.rel target = $region3
    $region8: #{pam_forward.3} parent=1 // loop_exit
      _

</llo_original>
